<compile_context>
chip_gen: v5e
topology: v5e:2x2
jax: 0.10.0
libtpu: 0.0.40
codegen_flags: <defaults>
</compile_context>

<pallas_src>
import numpy as np
import jax
import jax.numpy as jnp
from jax import lax
from jax.experimental import pallas as pl
from jax.experimental.pallas import tpu as pltpu


def _make_kernel(L, NB, *, loc_weighted_sum, scale_weighted_sum, use_loc_emb,
                 eps=1e-6, ln_eps=1e-5):
    """Build the kernel; L/NB and the boolean flags are baked in at trace time."""
    dot_kw = dict(preferred_element_type=jnp.float32,
                  precision=lax.Precision.HIGHEST)   # near-f32 MXU passes

    def kernel(x_ref, cst_ref, locs_l_ref, wct_ref, bct_ref, lembt_ref, gs_ref,
               o_ref):
        # x: (1, TM) -- flattened scalars on lanes.
        x = x_ref[...]

        # Per-(l, nb) column constants, k = l*NB + nb on sublanes.
        locs_k = cst_ref[:, 0:1]      # locs[l]
        iscl_k = cst_ref[:, 1:2]      # 1 / scales[nb]
        sww_k = cst_ref[:, 2:3]       # mean(wc^2)  per nb
        swb_k = cst_ref[:, 3:4]       # mean(wc*bc) per nb
        sbb_k = cst_ref[:, 4:5]       # mean(bc^2)  per nb

        d = x - locs_k                # (K1, TM): per-scalar distance to each location
        ad = jnp.abs(d)

        # ---- location weights (normalised over L) ----
        if loc_weighted_sum:
            d_l = x - locs_l_ref[...]                              # (L, TM)
            lraw_l = 1.0 / (jnp.log(jnp.abs(d_l) + 1.0) + eps)     # (L, TM)
            ltot = lraw_l[0:1, :]
            for l in range(1, L):                                  # exact unrolled sum
                ltot = ltot + lraw_l[l:l + 1, :]
            inv_ltot = pl.reciprocal(ltot, approx=False)           # one recip, then muls
            lw_l = lraw_l * inv_ltot                               # (L, TM)
            lraw_k = 1.0 / (jnp.log(ad + 1.0) + eps)               # (K1, TM)
            lw_k = lraw_k * inv_ltot                               # (K1, TM)
        else:
            lw_l = jnp.ones((L,) + x.shape[1:], jnp.float32)
            lw_k = None

        # ---- scale weights (normalised over NB within each location) ----
        if scale_weighted_sum:
            sraw = 1.0 / (jnp.abs(jnp.log(ad * iscl_k + eps)) + eps)   # (K1, TM)
            stot = jnp.dot(gs_ref[...], sraw, **dot_kw)                # per-l totals (MXU)
            sw = sraw * pl.reciprocal(stot, approx=False)
        else:
            sw = None

        # ---- analytic LayerNorm: variance is a quadratic in d (no reductions) ----
        var = (d * d) * sww_k + (2.0 * d) * swb_k + sbb_k
        inv = lax.rsqrt(var + ln_eps)                                  # (K1, TM)

        wgt = inv
        if scale_weighted_sum:
            wgt = wgt * sw
        if loc_weighted_sum:
            wgt = wgt * lw_k
        coef_w = wgt * d            # multiplies the centred-w rows
        coef_b = wgt                # multiplies the centred-(b*scale) rows

        # ---- accumulate all L*NB terms as small MXU matmuls -> (C, TM), lane-dense ----
        out = (jnp.dot(wct_ref[...], coef_w, **dot_kw)
               + jnp.dot(bct_ref[...], coef_b, **dot_kw))
        if use_loc_emb:
            out = out + jnp.dot(lembt_ref[...], lw_l, **dot_kw)
        o_ref[...] = out

    return kernel


def multibias_encoder(x, ws, bs, loc_emb, locs, scales, *,
                      loc_weighted_sum=True, scale_weighted_sum=True,
                      use_loc_emb=True, tm=1024):
    """Pallas TPU implementation of MultiBiasEncoder.forward."""
    B = x.shape[0]
    xf = x.reshape(B, -1) if x.ndim > 2 else x
    F = xf.shape[1]
    M = B * F
    NB, C = ws.shape
    L = len(locs)
    K1 = L * NB

    locs_np = np.asarray(locs, np.float32)
    scales_np = np.asarray(scales, np.float32)

    ws = ws.astype(jnp.float32)
    bs = bs.astype(jnp.float32)
    loc_emb = loc_emb.astype(jnp.float32)

    # ---- hoisted preprocessing: centred params + LayerNorm moments (review item) ----
    bsc = bs * jnp.asarray(scales_np)[:, None]                # b * scale
    wc = ws - jnp.mean(ws, axis=-1, keepdims=True)
    bc = bsc - jnp.mean(bsc, axis=-1, keepdims=True)
    sww = jnp.mean(wc * wc, axis=-1)                          # (NB,)
    swb = jnp.mean(wc * bc, axis=-1)
    sbb = jnp.mean(bc * bc, axis=-1)

    # Per-k constants, k = l*NB + nb (sublane axis inside the kernel).
    cst = jnp.stack([
        jnp.asarray(np.repeat(locs_np, NB)),                  # locs[l]
        jnp.asarray(np.tile(1.0 / scales_np, L)),             # 1/scales[nb]
        jnp.tile(sww, L), jnp.tile(swb, L), jnp.tile(sbb, L),
    ], axis=1).astype(jnp.float32)                            # (K1, 5)
    locs_l = jnp.asarray(locs_np).reshape(L, 1)               # (L, 1)
    wct = jnp.tile(wc, (L, 1)).T                              # (C, K1)
    bct = jnp.tile(bc, (L, 1)).T                              # (C, K1)
    lembt = loc_emb.T                                         # (C, L)
    gs = jnp.asarray(np.kron(np.eye(L, dtype=np.float32),
                             np.ones((NB, NB), np.float32)))  # (K1, K1) group-sum matrix

    # ---- lane-major x and lane-dense output tiling (big tm, clamp to problem) ----
    tm = max(128, min(int(tm), pl.cdiv(M, 128) * 128))
    Mp = pl.cdiv(M, tm) * tm
    x_row = xf.reshape(1, M).astype(jnp.float32)
    if Mp != M:
        x_row = jnp.pad(x_row, ((0, 0), (0, Mp - M)))

    kernel = _make_kernel(L, NB,
                          loc_weighted_sum=loc_weighted_sum,
                          scale_weighted_sum=scale_weighted_sum,
                          use_loc_emb=use_loc_emb)

    out = pl.pallas_call(
        kernel,
        out_shape=jax.ShapeDtypeStruct((C, Mp), jnp.float32),
        grid=(Mp // tm,),
        in_specs=[
            pl.BlockSpec((1, tm), lambda i: (0, i)),          # x (lanes = flat scalars)
            pl.BlockSpec((K1, 5), lambda i: (0, 0)),          # per-(l,nb) constants
            pl.BlockSpec((L, 1), lambda i: (0, 0)),           # locs column
            pl.BlockSpec((C, K1), lambda i: (0, 0)),          # wc tiled, transposed
            pl.BlockSpec((C, K1), lambda i: (0, 0)),          # bc tiled, transposed
            pl.BlockSpec((C, L), lambda i: (0, 0)),           # loc_emb transposed
            pl.BlockSpec((K1, K1), lambda i: (0, 0)),         # scale group-sum matrix
        ],
        out_specs=pl.BlockSpec((C, tm), lambda i: (0, i)),    # lane-dense (C, tm) stores
        compiler_params=pltpu.CompilerParams(
            dimension_semantics=("parallel",)),               # shards across TCs on v7x
    )(x_row, cst, locs_l, wct, bct, lembt, gs)

    # Layout plumbing only: back to (M, C) -> (B, F, C).
    return out[:, :M].T.reshape(B, F, C)


def ref_forward(x, ws, bs, loc_emb, locs, scales, *,
                loc_weighted_sum=True, scale_weighted_sum=True, use_loc_emb=True):
    """Pure-JAX replica of the PyTorch forward for verification."""
    eps = 1e-6
    B = x.shape[0]
    enc = x.reshape(B, -1) if x.ndim > 2 else x
    locs_a = jnp.asarray(locs, jnp.float32)
    scales_a = jnp.asarray(scales, jnp.float32)
    loc_dis = enc[..., None] - locs_a                                  # (B,F,L)
    if loc_weighted_sum:
        loc_w = 1.0 / (jnp.log(jnp.abs(loc_dis) + 1.0) + eps)
        loc_w = loc_w / loc_w.sum(axis=-1, keepdims=True)
    if scale_weighted_sum:
        scale_w = 1.0 / (jnp.abs(jnp.log(jnp.abs(loc_dis[..., None]) / scales_a + eps)) + eps)
        scale_w = scale_w / scale_w.sum(axis=-1, keepdims=True)
    y = loc_dis[..., None, None] * ws + bs * scales_a[:, None]         # (B,F,L,NB,C)
    mu = y.mean(axis=-1, keepdims=True)
    var = ((y - mu) ** 2).mean(axis=-1, keepdims=True)
    y = (y - mu) / jnp.sqrt(var + 1e-5)
    if scale_weighted_sum:
        y = y * scale_w[..., None]
    y = y.sum(axis=-2)                                                 # (B,F,L,C)
    if use_loc_emb:
        y = y + loc_emb
    if loc_weighted_sum:
        y = y * loc_w[..., None]
    return y.sum(axis=-2)                                              # (B,F,C)


if __name__ == "__main__":
    # Config matching the module defaults (small, deterministic).
    num_bias = 5
    mb_emb_dim = 32
    base_bias = 10.0
    scales = [base_bias ** i for i in range(-(num_bias - 1) // 2, (num_bias + 1) // 2)]
    locs = [0.0, 1.0]

    key = jax.random.PRNGKey(0)
    k1, k2, k3, k4 = jax.random.split(key, 4)
    ws = jax.random.uniform(k1, (num_bias, mb_emb_dim), jnp.float32, -1.0, 1.0)
    bs = jax.random.uniform(k2, (num_bias, mb_emb_dim), jnp.float32, -1.0, 1.0)
    loc_emb = 0.02 * jax.random.truncated_normal(
        k3, -2.0, 2.0, (len(locs), mb_emb_dim), jnp.float32)
    # ndim > 2 input exercises the flatten path: (2, 8, 13) -> (2, 104), M = 208 (padded).
    x = 3.0 * jax.random.normal(k4, (2, 8, 13), jnp.float32)

    # tm=128 here so the padded M (256) gives a 2-step "parallel" grid (keeps both
    # v7x TensorCores busy); for real workloads the default tm=1024 is used.
    out = multibias_encoder(x, ws, bs, loc_emb, locs, scales,
                            loc_weighted_sum=True, scale_weighted_sum=True,
                            use_loc_emb=True, tm=128)
    out = jax.block_until_ready(out)

    ref = ref_forward(x, ws, bs, loc_emb, locs, scales,
                      loc_weighted_sum=True, scale_weighted_sum=True,
                      use_loc_emb=True)
    # Slightly relaxed vs 1e-3/1e-4: the analytic-LayerNorm rewrite changes summation order.
    np.testing.assert_allclose(np.asarray(out), np.asarray(ref), rtol=2e-3, atol=2e-4)
    assert out.shape == (2, 8 * 13, mb_emb_dim)
    print("KERNEL_OK")
</pallas_src>

<mosaic_0001>
module attributes {stable_mosaic.version = 11 : i64} {
  func.func @kernel(%arg0: i32, %arg1: memref<1x128xf32, #tpu.memory_space<vmem>>, %arg2: memref<10x5xf32, #tpu.memory_space<vmem>>, %arg3: memref<2x1xf32, #tpu.memory_space<vmem>>, %arg4: memref<32x10xf32, #tpu.memory_space<vmem>>, %arg5: memref<32x10xf32, #tpu.memory_space<vmem>>, %arg6: memref<32x2xf32, #tpu.memory_space<vmem>>, %arg7: memref<10x10xf32, #tpu.memory_space<vmem>>, %arg8: memref<32x128xf32, #tpu.memory_space<vmem>>) attributes {dimension_semantics = [#tpu.dimension_semantics<parallel>], iteration_bounds = array<i64: 2>, scalar_prefetch = 0 : i64, scratch_operands = 0 : i64, tpu.core_type = #tpu.core_type<tc>, window_params = [{transform_indices = @transform_0, window_bounds = array<i64: 1, 128>}, {pipeline_mode = #tpu.pipeline_mode<synchronous>, transform_indices = @transform_1, window_bounds = array<i64: 10, 5>}, {pipeline_mode = #tpu.pipeline_mode<synchronous>, transform_indices = @transform_2, window_bounds = array<i64: 2, 1>}, {pipeline_mode = #tpu.pipeline_mode<synchronous>, transform_indices = @transform_3, window_bounds = array<i64: 32, 10>}, {pipeline_mode = #tpu.pipeline_mode<synchronous>, transform_indices = @transform_4, window_bounds = array<i64: 32, 10>}, {pipeline_mode = #tpu.pipeline_mode<synchronous>, transform_indices = @transform_5, window_bounds = array<i64: 32, 2>}, {pipeline_mode = #tpu.pipeline_mode<synchronous>, transform_indices = @transform_6, window_bounds = array<i64: 10, 10>}, {transform_indices = @transform_7, window_bounds = array<i64: 32, 128>}]} {
    %c0 = arith.constant 0 : index
    %c0_0 = arith.constant 0 : index
    %0 = vector.load %arg1[%c0, %c0_0] : memref<1x128xf32, #tpu.memory_space<vmem>>, vector<1x128xf32>
    %c0_1 = arith.constant 0 : index
    %c0_2 = arith.constant 0 : index
    %1 = vector.load %arg2[%c0_1, %c0_2] : memref<10x5xf32, #tpu.memory_space<vmem>>, vector<10x1xf32>
    %c0_3 = arith.constant 0 : index
    %c1 = arith.constant 1 : index
    %2 = vector.load %arg2[%c0_3, %c1] : memref<10x5xf32, #tpu.memory_space<vmem>>, vector<10x1xf32>
    %c0_4 = arith.constant 0 : index
    %c2 = arith.constant 2 : index
    %3 = vector.load %arg2[%c0_4, %c2] : memref<10x5xf32, #tpu.memory_space<vmem>>, vector<10x1xf32>
    %c0_5 = arith.constant 0 : index
    %c3 = arith.constant 3 : index
    %4 = vector.load %arg2[%c0_5, %c3] : memref<10x5xf32, #tpu.memory_space<vmem>>, vector<10x1xf32>
    %c0_6 = arith.constant 0 : index
    %c4 = arith.constant 4 : index
    %5 = vector.load %arg2[%c0_6, %c4] : memref<10x5xf32, #tpu.memory_space<vmem>>, vector<10x1xf32>
    %6 = vector.broadcast %0 : vector<1x128xf32> to vector<10x128xf32>
    %7 = vector.broadcast %1 : vector<10x1xf32> to vector<10x128xf32>
    %8 = arith.subf %6, %7 : vector<10x128xf32>
    %9 = math.absf %8 : vector<10x128xf32>
    %c0_7 = arith.constant 0 : index
    %c0_8 = arith.constant 0 : index
    %10 = vector.load %arg3[%c0_7, %c0_8] : memref<2x1xf32, #tpu.memory_space<vmem>>, vector<2x1xf32>
    %11 = vector.broadcast %0 : vector<1x128xf32> to vector<2x128xf32>
    %12 = vector.broadcast %10 : vector<2x1xf32> to vector<2x128xf32>
    %13 = arith.subf %11, %12 : vector<2x128xf32>
    %14 = math.absf %13 : vector<2x128xf32>
    %cst = arith.constant 1.000000e+00 : f32
    %15 = vector.broadcast %cst : f32 to vector<2x128xf32>
    %16 = arith.addf %14, %15 : vector<2x128xf32>
    %17 = math.log %16 : vector<2x128xf32>
    %cst_9 = arith.constant 9.99999997E-7 : f32
    %18 = vector.broadcast %cst_9 : f32 to vector<2x128xf32>
    %19 = arith.addf %17, %18 : vector<2x128xf32>
    %cst_10 = arith.constant 1.000000e+00 : f32
    %20 = vector.broadcast %cst_10 : f32 to vector<2x128xf32>
    %21 = arith.divf %20, %19 : vector<2x128xf32>
    %22 = vector.extract_strided_slice %21 {offsets = [0, 0], sizes = [1, 128], strides = [1, 1]} : vector<2x128xf32> to vector<1x128xf32>
    %23 = vector.extract_strided_slice %21 {offsets = [1, 0], sizes = [1, 128], strides = [1, 1]} : vector<2x128xf32> to vector<1x128xf32>
    %24 = arith.addf %22, %23 : vector<1x128xf32>
    %25 = tpu.reciprocal %24 : vector<1x128xf32> -> vector<1x128xf32>
    %26 = vector.broadcast %25 : vector<1x128xf32> to vector<2x128xf32>
    %27 = arith.mulf %21, %26 : vector<2x128xf32>
    %cst_11 = arith.constant 1.000000e+00 : f32
    %28 = vector.broadcast %cst_11 : f32 to vector<10x128xf32>
    %29 = arith.addf %9, %28 : vector<10x128xf32>
    %30 = math.log %29 : vector<10x128xf32>
    %cst_12 = arith.constant 9.99999997E-7 : f32
    %31 = vector.broadcast %cst_12 : f32 to vector<10x128xf32>
    %32 = arith.addf %30, %31 : vector<10x128xf32>
    %cst_13 = arith.constant 1.000000e+00 : f32
    %33 = vector.broadcast %cst_13 : f32 to vector<10x128xf32>
    %34 = arith.divf %33, %32 : vector<10x128xf32>
    %35 = vector.broadcast %25 : vector<1x128xf32> to vector<10x128xf32>
    %36 = arith.mulf %34, %35 : vector<10x128xf32>
    %37 = vector.broadcast %2 : vector<10x1xf32> to vector<10x128xf32>
    %38 = arith.mulf %9, %37 : vector<10x128xf32>
    %cst_14 = arith.constant 9.99999997E-7 : f32
    %39 = vector.broadcast %cst_14 : f32 to vector<10x128xf32>
    %40 = arith.addf %38, %39 : vector<10x128xf32>
    %41 = math.log %40 : vector<10x128xf32>
    %42 = math.absf %41 : vector<10x128xf32>
    %cst_15 = arith.constant 9.99999997E-7 : f32
    %43 = vector.broadcast %cst_15 : f32 to vector<10x128xf32>
    %44 = arith.addf %42, %43 : vector<10x128xf32>
    %cst_16 = arith.constant 1.000000e+00 : f32
    %45 = vector.broadcast %cst_16 : f32 to vector<10x128xf32>
    %46 = arith.divf %45, %44 : vector<10x128xf32>
    %c0_17 = arith.constant 0 : index
    %c0_18 = arith.constant 0 : index
    %47 = vector.load %arg7[%c0_17, %c0_18] : memref<10x10xf32, #tpu.memory_space<vmem>>, vector<10x10xf32>
    %cst_19 = arith.constant dense<0.000000e+00> : vector<10x128xf32>
    %48 = tpu.matmul %47, %46, %cst_19 {dimension_numbers = #tpu.dot_dimension_numbers<[1], [0], [0], [1], [0, 0, 1, 1], [], []>, precision = #tpu.contract_precision<fp32>} : vector<10x10xf32>, vector<10x128xf32>, vector<10x128xf32> -> vector<10x128xf32>
    %49 = tpu.reciprocal %48 : vector<10x128xf32> -> vector<10x128xf32>
    %50 = arith.mulf %46, %49 : vector<10x128xf32>
    %51 = arith.mulf %8, %8 : vector<10x128xf32>
    %52 = vector.broadcast %3 : vector<10x1xf32> to vector<10x128xf32>
    %53 = arith.mulf %51, %52 : vector<10x128xf32>
    %cst_20 = arith.constant 2.000000e+00 : f32
    %54 = vector.broadcast %cst_20 : f32 to vector<10x128xf32>
    %55 = arith.mulf %54, %8 : vector<10x128xf32>
    %56 = vector.broadcast %4 : vector<10x1xf32> to vector<10x128xf32>
    %57 = arith.mulf %55, %56 : vector<10x128xf32>
    %58 = arith.addf %53, %57 : vector<10x128xf32>
    %59 = vector.broadcast %5 : vector<10x1xf32> to vector<10x128xf32>
    %60 = arith.addf %58, %59 : vector<10x128xf32>
    %cst_21 = arith.constant 9.99999974E-6 : f32
    %61 = vector.broadcast %cst_21 : f32 to vector<10x128xf32>
    %62 = arith.addf %60, %61 : vector<10x128xf32>
    %63 = math.rsqrt %62 : vector<10x128xf32>
    %64 = arith.mulf %63, %50 : vector<10x128xf32>
    %65 = arith.mulf %64, %36 : vector<10x128xf32>
    %66 = arith.mulf %65, %8 : vector<10x128xf32>
    %c0_22 = arith.constant 0 : index
    %c0_23 = arith.constant 0 : index
    %67 = vector.load %arg4[%c0_22, %c0_23] : memref<32x10xf32, #tpu.memory_space<vmem>>, vector<32x10xf32>
    %cst_24 = arith.constant dense<0.000000e+00> : vector<32x128xf32>
    %68 = tpu.matmul %67, %66, %cst_24 {dimension_numbers = #tpu.dot_dimension_numbers<[1], [0], [0], [1], [0, 0, 1, 1], [], []>, precision = #tpu.contract_precision<fp32>} : vector<32x10xf32>, vector<10x128xf32>, vector<32x128xf32> -> vector<32x128xf32>
    %c0_25 = arith.constant 0 : index
    %c0_26 = arith.constant 0 : index
    %69 = vector.load %arg5[%c0_25, %c0_26] : memref<32x10xf32, #tpu.memory_space<vmem>>, vector<32x10xf32>
    %cst_27 = arith.constant dense<0.000000e+00> : vector<32x128xf32>
    %70 = tpu.matmul %69, %65, %cst_27 {dimension_numbers = #tpu.dot_dimension_numbers<[1], [0], [0], [1], [0, 0, 1, 1], [], []>, precision = #tpu.contract_precision<fp32>} : vector<32x10xf32>, vector<10x128xf32>, vector<32x128xf32> -> vector<32x128xf32>
    %71 = arith.addf %68, %70 : vector<32x128xf32>
    %c0_28 = arith.constant 0 : index
    %c0_29 = arith.constant 0 : index
    %72 = vector.load %arg6[%c0_28, %c0_29] : memref<32x2xf32, #tpu.memory_space<vmem>>, vector<32x2xf32>
    %cst_30 = arith.constant dense<0.000000e+00> : vector<32x128xf32>
    %73 = tpu.matmul %72, %27, %cst_30 {dimension_numbers = #tpu.dot_dimension_numbers<[1], [0], [0], [1], [0, 0, 1, 1], [], []>, precision = #tpu.contract_precision<fp32>} : vector<32x2xf32>, vector<2x128xf32>, vector<32x128xf32> -> vector<32x128xf32>
    %74 = arith.addf %71, %73 : vector<32x128xf32>
    %c0_31 = arith.constant 0 : index
    %c0_32 = arith.constant 0 : index
    %75 = vector.load %arg8[%c0_31, %c0_32] : memref<32x128xf32, #tpu.memory_space<vmem>>, vector<32x128xf32>
    tpu.vector_store %arg8[%c0_31, %c0_32], %74 {strides = array<i32>} : memref<32x128xf32, #tpu.memory_space<vmem>>, vector<32x128xf32>,
    return
  }
  func.func @transform_0(%arg0: i32) -> (i32, i32) {
    %c0_i32 = arith.constant 0 : i32
    %c0_i32_0 = arith.constant 0 : i32
    return %c0_i32, %arg0 : i32, i32
  }
  func.func @transform_1(%arg0: i32) -> (i32, i32) {
    %c0_i32 = arith.constant 0 : i32
    %c0_i32_0 = arith.constant 0 : i32
    %c0_i32_1 = arith.constant 0 : i32
    return %c0_i32, %c0_i32_0 : i32, i32
  }
  func.func @transform_2(%arg0: i32) -> (i32, i32) {
    %c0_i32 = arith.constant 0 : i32
    %c0_i32_0 = arith.constant 0 : i32
    %c0_i32_1 = arith.constant 0 : i32
    return %c0_i32, %c0_i32_0 : i32, i32
  }
  func.func @transform_3(%arg0: i32) -> (i32, i32) {
    %c0_i32 = arith.constant 0 : i32
    %c0_i32_0 = arith.constant 0 : i32
    %c0_i32_1 = arith.constant 0 : i32
    return %c0_i32, %c0_i32_0 : i32, i32
  }
  func.func @transform_4(%arg0: i32) -> (i32, i32) {
    %c0_i32 = arith.constant 0 : i32
    %c0_i32_0 = arith.constant 0 : i32
    %c0_i32_1 = arith.constant 0 : i32
    return %c0_i32, %c0_i32_0 : i32, i32
  }
  func.func @transform_5(%arg0: i32) -> (i32, i32) {
    %c0_i32 = arith.constant 0 : i32
    %c0_i32_0 = arith.constant 0 : i32
    %c0_i32_1 = arith.constant 0 : i32
    return %c0_i32, %c0_i32_0 : i32, i32
  }
  func.func @transform_6(%arg0: i32) -> (i32, i32) {
    %c0_i32 = arith.constant 0 : i32
    %c0_i32_0 = arith.constant 0 : i32
    %c0_i32_1 = arith.constant 0 : i32
    return %c0_i32, %c0_i32_0 : i32, i32
  }
  func.func @transform_7(%arg0: i32) -> (i32, i32) {
    %c0_i32 = arith.constant 0 : i32
    %c0_i32_0 = arith.constant 0 : i32
    return %c0_i32, %arg0 : i32, i32
  }
}

</mosaic_0001>

<llo_original>
// kernel: tpu_custom_call.1
$region0: #{tpu_custom_call.1}
  #allocation0 [shape = 'u32[]', space=smem, size = 0x4, offset = 0x4, fixed_abs, tag = 'smem constant byte address 0x4 - core index']
  #allocation1 [shape = 'u32[72,128]{1,0:T(1,128)}', space=vmem, size = 0x9000, scoped, tag = 'internal scratch']
  %s0 = inlined_call_operand.vmem [shape: f32[1,256], index: 0, kind: input, shape index: {}]
  %s1 = inlined_call_operand.vmem [shape: f32[10,5], index: 1, kind: input, shape index: {}]
  %s2 = inlined_call_operand.vmem [shape: f32[2,1], index: 2, kind: input, shape index: {}]
  %s3 = inlined_call_operand.vmem [shape: f32[32,10], index: 3, kind: input, shape index: {}]
  %s4 = inlined_call_operand.vmem [shape: f32[32,10], index: 4, kind: input, shape index: {}]
  %s5 = inlined_call_operand.vmem [shape: f32[32,2], index: 5, kind: input, shape index: {}]
  %s6 = inlined_call_operand.vmem [shape: f32[10,10], index: 6, kind: input, shape index: {}]
  %s7 = inlined_call_operand.hbm [shape: f32[32,256], index: 7, kind: output, shape index: {}]
  %s8 = sld [smem:[#allocation0]]
  $region61: #{tpu_custom_call.1} parent=0
    _
  %s10 = ssub.s32 1, %s8
  %s11 = scalar_select 0, %s10, %s8
  $region1: #{tpu_custom_call.1} parent=0
    #allocation2 [shape = 'u8[32768]{0}', space=vmem, size = 0x8000, scoped, tag = 'output window, operand 0']
    #allocation3 [shape = 's32[2]{0}', space=sflag, size = 0x8, scoped, tag = 'scoped memory for tpu_custom_call.1']
    %12 = vsyncpa [#allocation3], 0
    %s13 = scalar_lea.sflag [#allocation3], 1
    %14 = vsyncpa %s13, 0
    loop: start=0, step=1, limit=4
    $region2: #{tpu_custom_call.1} parent=1 // loop_pre_header
      _
    $region3: #{tpu_custom_call.1} parent=1 // loop_header
      %s16 = sphi 0, %s20
      %p17 = scmp.ge.s32.totalorder %s16, 4
      %s26 = sphi 0, %s28
      %s29 = sphi 0, %s26
      %s30 = sphi 0, %s29
      %s46 = sphi 0, %s30
      %s50 = sphi 0, %s50
      %s52 = sphi 0, %s50
      %s53 = sphi 0, %s52
      %s67 = sphi 0, %s53
      %s71 = sphi 0, %s71
      %s73 = sphi 0, %s71
      %s74 = sphi 0, %s73
      %s88 = sphi 0, %s74
      %s92 = sphi 0, %s92
      %s94 = sphi 0, %s92
      %s95 = sphi 0, %s94
      %s109 = sphi 0, %s95
      %s113 = sphi 0, %s113
      %s115 = sphi 0, %s113
      %s116 = sphi 0, %s115
      %s130 = sphi 0, %s116
      %s134 = sphi 0, %s134
      %s136 = sphi 0, %s134
      %s137 = sphi 0, %s136
      %s151 = sphi 0, %s137
      %s155 = sphi 0, %s155
      %s157 = sphi 0, %s155
      %s158 = sphi 0, %s157
      %s172 = sphi 0, %s158
      %s178 = sphi 0, %s180
      %s181 = sphi 0, %s178
      %s182 = sphi 0, %s181
      %s198 = sphi 0, %s182
    $region4: #{tpu_custom_call.1} parent=1 // loop_header_branch
      %19 = sbr.rel (%p17) target = $region8
    $region5: #{tpu_custom_call.1} parent=1 // loop_body
      %s21 = ssub.s32 %s16, 1
      %s22 = ssub.s32 %s16, 2
      %s23 = sadd.s32 %s16, 1
      %s24 = ssub.s32 %s16, %s23
      %p25 = scmp.eq.s32.totalorder %s24, 0
      %s27 = sadd.s32 %s26, 1
      %s28 = scalar_select %p25, %s26, %s27
      %p31 = pneg %p25
      %p32 = scmp.eq.s32.totalorder %s16, 1
      %p33 = por %p31, %p32
      %p34 = scmp.ne.s32.totalorder %s26, %s29
      %p35 = scmp.eq.s32.totalorder %s16, 0
      %p36 = por %p34, %p35
      %p37 = scmp.ne.s32.totalorder %s26, %s29
      %p38 = scmp.eq.s32.totalorder %s21, 1
      %p39 = por %p37, %p38
      %p40 = scmp.ne.s32.totalorder %s29, %s30
      %p41 = scmp.eq.s32.totalorder %s21, 0
      %p42 = por %p40, %p41
      %p43 = scmp.ne.s32.totalorder %s29, %s30
      %p44 = scmp.eq.s32.totalorder %s22, 1
      %p45 = por %p43, %p44
      %p47 = scmp.ne.s32.totalorder %s30, %s46
      %p48 = scmp.eq.s32.totalorder %s22, 0
      %p49 = por %p47, %p48
      %s51 = sadd.s32 %s50, 1
      %p54 = scmp.eq.s32.totalorder %s16, 1
      %p55 = scmp.ne.s32.totalorder %s50, %s52
      %p56 = scmp.eq.s32.totalorder %s16, 0
      %p57 = por %p55, %p56
      %p58 = scmp.ne.s32.totalorder %s50, %s52
      %p59 = scmp.eq.s32.totalorder %s21, 1
      %p60 = por %p58, %p59
      %p61 = scmp.ne.s32.totalorder %s52, %s53
      %p62 = scmp.eq.s32.totalorder %s21, 0
      %p63 = por %p61, %p62
      %p64 = scmp.ne.s32.totalorder %s52, %s53
      %p65 = scmp.eq.s32.totalorder %s22, 1
      %p66 = por %p64, %p65
      %p68 = scmp.ne.s32.totalorder %s53, %s67
      %p69 = scmp.eq.s32.totalorder %s22, 0
      %p70 = por %p68, %p69
      %s72 = sadd.s32 %s71, 1
      %p75 = scmp.eq.s32.totalorder %s16, 1
      %p76 = scmp.ne.s32.totalorder %s71, %s73
      %p77 = scmp.eq.s32.totalorder %s16, 0
      %p78 = por %p76, %p77
      %p79 = scmp.ne.s32.totalorder %s71, %s73
      %p80 = scmp.eq.s32.totalorder %s21, 1
      %p81 = por %p79, %p80
      %p82 = scmp.ne.s32.totalorder %s73, %s74
      %p83 = scmp.eq.s32.totalorder %s21, 0
      %p84 = por %p82, %p83
      %p85 = scmp.ne.s32.totalorder %s73, %s74
      %p86 = scmp.eq.s32.totalorder %s22, 1
      %p87 = por %p85, %p86
      %p89 = scmp.ne.s32.totalorder %s74, %s88
      %p90 = scmp.eq.s32.totalorder %s22, 0
      %p91 = por %p89, %p90
      %s93 = sadd.s32 %s92, 1
      %p96 = scmp.eq.s32.totalorder %s16, 1
      %p97 = scmp.ne.s32.totalorder %s92, %s94
      %p98 = scmp.eq.s32.totalorder %s16, 0
      %p99 = por %p97, %p98
      %p100 = scmp.ne.s32.totalorder %s92, %s94
      %p101 = scmp.eq.s32.totalorder %s21, 1
      %p102 = por %p100, %p101
      %p103 = scmp.ne.s32.totalorder %s94, %s95
      %p104 = scmp.eq.s32.totalorder %s21, 0
      %p105 = por %p103, %p104
      %p106 = scmp.ne.s32.totalorder %s94, %s95
      %p107 = scmp.eq.s32.totalorder %s22, 1
      %p108 = por %p106, %p107
      %p110 = scmp.ne.s32.totalorder %s95, %s109
      %p111 = scmp.eq.s32.totalorder %s22, 0
      %p112 = por %p110, %p111
      %s114 = sadd.s32 %s113, 1
      %p117 = scmp.eq.s32.totalorder %s16, 1
      %p118 = scmp.ne.s32.totalorder %s113, %s115
      %p119 = scmp.eq.s32.totalorder %s16, 0
      %p120 = por %p118, %p119
      %p121 = scmp.ne.s32.totalorder %s113, %s115
      %p122 = scmp.eq.s32.totalorder %s21, 1
      %p123 = por %p121, %p122
      %p124 = scmp.ne.s32.totalorder %s115, %s116
      %p125 = scmp.eq.s32.totalorder %s21, 0
      %p126 = por %p124, %p125
      %p127 = scmp.ne.s32.totalorder %s115, %s116
      %p128 = scmp.eq.s32.totalorder %s22, 1
      %p129 = por %p127, %p128
      %p131 = scmp.ne.s32.totalorder %s116, %s130
      %p132 = scmp.eq.s32.totalorder %s22, 0
      %p133 = por %p131, %p132
      %s135 = sadd.s32 %s134, 1
      %p138 = scmp.eq.s32.totalorder %s16, 1
      %p139 = scmp.ne.s32.totalorder %s134, %s136
      %p140 = scmp.eq.s32.totalorder %s16, 0
      %p141 = por %p139, %p140
      %p142 = scmp.ne.s32.totalorder %s134, %s136
      %p143 = scmp.eq.s32.totalorder %s21, 1
      %p144 = por %p142, %p143
      %p145 = scmp.ne.s32.totalorder %s136, %s137
      %p146 = scmp.eq.s32.totalorder %s21, 0
      %p147 = por %p145, %p146
      %p148 = scmp.ne.s32.totalorder %s136, %s137
      %p149 = scmp.eq.s32.totalorder %s22, 1
      %p150 = por %p148, %p149
      %p152 = scmp.ne.s32.totalorder %s137, %s151
      %p153 = scmp.eq.s32.totalorder %s22, 0
      %p154 = por %p152, %p153
      %s156 = sadd.s32 %s155, 1
      %p159 = scmp.eq.s32.totalorder %s16, 1
      %p160 = scmp.ne.s32.totalorder %s155, %s157
      %p161 = scmp.eq.s32.totalorder %s16, 0
      %p162 = por %p160, %p161
      %p163 = scmp.ne.s32.totalorder %s155, %s157
      %p164 = scmp.eq.s32.totalorder %s21, 1
      %p165 = por %p163, %p164
      %p166 = scmp.ne.s32.totalorder %s157, %s158
      %p167 = scmp.eq.s32.totalorder %s21, 0
      %p168 = por %p166, %p167
      %p169 = scmp.ne.s32.totalorder %s157, %s158
      %p170 = scmp.eq.s32.totalorder %s22, 1
      %p171 = por %p169, %p170
      %p173 = scmp.ne.s32.totalorder %s158, %s172
      %p174 = scmp.eq.s32.totalorder %s22, 0
      %p175 = por %p173, %p174
      %s176 = ssub.s32 %s16, %s23
      %p177 = scmp.eq.s32.totalorder %s176, 0
      %s179 = sadd.s32 %s178, 1
      %s180 = scalar_select %p177, %s178, %s179
      %p183 = pneg %p177
      %p184 = scmp.eq.s32.totalorder %s16, 1
      %p185 = por %p183, %p184
      %p186 = scmp.ne.s32.totalorder %s178, %s181
      %p187 = scmp.eq.s32.totalorder %s16, 0
      %p188 = por %p186, %p187
      %p189 = scmp.ne.s32.totalorder %s178, %s181
      %p190 = scmp.eq.s32.totalorder %s21, 1
      %p191 = por %p189, %p190
      %p192 = scmp.ne.s32.totalorder %s181, %s182
      %p193 = scmp.eq.s32.totalorder %s21, 0
      %p194 = por %p192, %p193
      %p195 = scmp.ne.s32.totalorder %s181, %s182
      %p196 = scmp.eq.s32.totalorder %s22, 1
      %p197 = por %p195, %p196
      %p199 = scmp.ne.s32.totalorder %s182, %s198
      %p200 = scmp.eq.s32.totalorder %s22, 0
      %p201 = por %p199, %p200
      %p202 = scmp.le.s32.totalorder 1, %s16
      %p203 = scmp.lt.s32.totalorder %s16, 3
      %p204 = pnand %p202, %p203
      %p205 = pneg %p204
      // Predicated region
      $region9: #{tpu_custom_call.1} parent=5 // pred_check
        _
      $region10: #{tpu_custom_call.1} parent=5 // pred_check_branch
        %207 = sbr.rel (%p204) target = $region12
      $region11: #{tpu_custom_call.1} parent=5 // pred_region
        %s208 = ssub.s32 %s16, 1
        // Predicated region
        $region13: #{tpu_custom_call.1} parent=11 // pred_check
          %p209 = pneg %p63
        $region14: #{tpu_custom_call.1} parent=11 // pred_check_branch
          %211 = sbr.rel (%p209) target = $region16
        $region15: #{tpu_custom_call.1} parent=11 // pred_region
          _
        $region16: #{tpu_custom_call.1} parent=11 // pred_fallthru
          _
        // Predicated region
        $region17: #{tpu_custom_call.1} parent=11 // pred_check
          %p212 = pneg %p84
        $region18: #{tpu_custom_call.1} parent=11 // pred_check_branch
          %214 = sbr.rel (%p212) target = $region20
        $region19: #{tpu_custom_call.1} parent=11 // pred_region
          _
        $region20: #{tpu_custom_call.1} parent=11 // pred_fallthru
          _
        // Predicated region
        $region21: #{tpu_custom_call.1} parent=11 // pred_check
          %p215 = pneg %p105
        $region22: #{tpu_custom_call.1} parent=11 // pred_check_branch
          %217 = sbr.rel (%p215) target = $region24
        $region23: #{tpu_custom_call.1} parent=11 // pred_region
          _
        $region24: #{tpu_custom_call.1} parent=11 // pred_fallthru
          _
        // Predicated region
        $region25: #{tpu_custom_call.1} parent=11 // pred_check
          %p218 = pneg %p126
        $region26: #{tpu_custom_call.1} parent=11 // pred_check_branch
          %220 = sbr.rel (%p218) target = $region28
        $region27: #{tpu_custom_call.1} parent=11 // pred_region
          _
        $region28: #{tpu_custom_call.1} parent=11 // pred_fallthru
          _
        // Predicated region
        $region29: #{tpu_custom_call.1} parent=11 // pred_check
          %p221 = pneg %p147
        $region30: #{tpu_custom_call.1} parent=11 // pred_check_branch
          %223 = sbr.rel (%p221) target = $region32
        $region31: #{tpu_custom_call.1} parent=11 // pred_region
          _
        $region32: #{tpu_custom_call.1} parent=11 // pred_fallthru
          _
        // Predicated region
        $region33: #{tpu_custom_call.1} parent=11 // pred_check
          %p224 = pneg %p168
        $region34: #{tpu_custom_call.1} parent=11 // pred_check_branch
          %226 = sbr.rel (%p224) target = $region36
        $region35: #{tpu_custom_call.1} parent=11 // pred_region
          _
        $region36: #{tpu_custom_call.1} parent=11 // pred_fallthru
          _
      $region12: #{tpu_custom_call.1} parent=5 // pred_fallthru
        _
      %p227 = scmp.lt.s32.totalorder %s16, 2
      // Predicated region
      $region37: #{tpu_custom_call.1} parent=5 // pred_check
        %p228 = pneg %p227
      $region38: #{tpu_custom_call.1} parent=5 // pred_check_branch
        %230 = sbr.rel (%p228) target = $region40
      $region39: #{tpu_custom_call.1} parent=5 // pred_region
        // Predicated region
        $region41: #{tpu_custom_call.1} parent=39 // pred_check
          %p231 = pneg %p36
        $region42: #{tpu_custom_call.1} parent=39 // pred_check_branch
          %233 = sbr.rel (%p231) target = $region44
        $region43: #{tpu_custom_call.1} parent=39 // pred_region
          %p234 = scmp.lt.s32.totalorder %s16, 1
          %s235 = scalar_select %p234, %s16, 1
          %s236 = scalar_lea.vmem %s0, %s235
        $region44: #{tpu_custom_call.1} parent=39 // pred_fallthru
          _
      $region40: #{tpu_custom_call.1} parent=5 // pred_fallthru
        _
      %p237 = scmp.le.s32.totalorder 1, %s16
      %p238 = scmp.lt.s32.totalorder %s16, 3
      %p239 = pnand %p237, %p238
      %p240 = pneg %p239
      // Predicated region
      $region45: #{tpu_custom_call.1} parent=5 // pred_check
        _
      $region46: #{tpu_custom_call.1} parent=5 // pred_check_branch
        %242 = sbr.rel (%p239) target = $region48
      $region47: #{tpu_custom_call.1} parent=5 // pred_region
        %s243 = ssub.s32 %s16, 1
        %p244 = scmp.lt.s32.totalorder %s21, 1
        %s245 = scalar_select %p244, %s21, 1
        %s246 = scalar_lea.vmem %s0, %s245
        %p247 = pneg %p42
        %p248 = pneg %p39
        %p249 = pneg %p63
        %p250 = pneg %p60
        %p251 = pneg %p84
        %p252 = pneg %p81
        %p253 = pneg %p105
        %p254 = pneg %p102
        %p255 = pneg %p126
        %p256 = pneg %p123
        %p257 = pneg %p147
        %p258 = pneg %p144
        %p259 = pneg %p168
        %p260 = pneg %p165
        %p261 = pneg %p194
        %p262 = pneg %p191
        %s263 = sand.u32 %s181, 1
        %s264 = scalar_lea.sflag [#allocation3], %s263
        %s265 = sand.u32 %s181, 1
        %s266 = smul.addr %s265, 32
        %s267 = scalar_lea.vmem [#allocation2], %s266
        %p268 = scmp.lt.s32.totalorder %s21, 1
        %s269 = scalar_select %p268, %s21, 1
        %s270 = scalar_lea.vmem %s0, %s269
        %v271 = vld [vmem:[%s270] sm:$0x1]
        %v272 = vld [vmem:[%s1] sm:$0xff]
        %v273 = vld [vmem:[%s1 + $0x8] sm:$0x3]
        %v275 = vperm.slane %v271, 0
        %278 = vset.pattern.permute.xlu0 0
        %279 = vperm.xlu0 %278, %v272
        %v280 = vpop.permute.xlu0 %279
        %283 = vset.pattern.permute.xlu0 0
        %284 = vperm.xlu0 %283, %v273
        %v285 = vpop.permute.xlu0 %284
        %v287 = vsub.f32 %v275, %v280
        %v288 = vsub.f32 %v275, %v285
        %v289 = vand.u32 2147483647, %v287
        %v290 = vand.u32 2147483647, %v288
        %v291 = vld [vmem:[%s2] sm:$0x3]
        %293 = vset.pattern.permute.xlu0 0
        %294 = vperm.xlu0 %293, %v291
        %v295 = vpop.permute.xlu0 %294
        %v297 = vsub.f32 %v275, %v295
        %v298 = vand.u32 2147483647, %v297
        %v299 = vadd.f32 %v298, 1.0
        %v300 = vlog2.pop %v299
        %v301 = vmul.f32 %v300, 0.6931472
        %v302 = vadd.f32 %v301, 1e-06
        %v303 = vrcp.pop %v302
        %v304 = vmul.f32 %v302, %v303
        %v305 = vsub.f32 1.0, %v304
        %v306 = vmul.f32 %v303, %v305
        %v307 = vadd.f32 %v303, %v306
        %vm308 = vweird.f32 %v302
        %vm309 = vweird.f32 %v303
        %vm310 = vmor %vm308, %vm309
        %v311 = vsel %vm310, %v303, %v307
        %v312 = vand.u32 2147483647, %v302
        %vm313 = vcmp.eq.f32.partialorder %v312, 8.507059e+37
        %v314 = vand.u32 %v302, 2147483648
        %v315 = vor.u32 1.1754944e-38, %v314
        %v316 = vsel %vm313, %v315, %v311
        %v317 = vmul.f32 1.0, %v316
        %v319 = vrot.slane %v317, 1
        %v321 = vadd.f32 %v317, %v319
        %v322 = vrcp.pop %v321
        %v323 = vmul.f32 %v321, %v322
        %v324 = vsub.f32 1.0, %v323
        %v325 = vmul.f32 %v322, %v324
        %v326 = vadd.f32 %v322, %v325
        %vm327 = vweird.f32 %v321
        %vm328 = vweird.f32 %v322
        %vm329 = vmor %vm327, %vm328
        %v330 = vsel %vm329, %v322, %v326
        %v331 = vand.u32 2147483647, %v321
        %vm332 = vcmp.eq.f32.partialorder %v331, 8.507059e+37
        %v333 = vand.u32 %v321, 2147483648
        %v334 = vor.u32 1.1754944e-38, %v333
        %v335 = vsel %vm332, %v334, %v330
        %v336 = vperm.slane %v335, 0
        %v337 = vmul.f32 %v317, %v336
        %v338 = vadd.f32 %v289, 1.0
        %v339 = vadd.f32 %v290, 1.0
        %v340 = vlog2.pop %v338
        %v341 = vmul.f32 %v340, 0.6931472
        %v342 = vlog2.pop %v339
        %v343 = vmul.f32 %v342, 0.6931472
        %v344 = vadd.f32 %v341, 1e-06
        %v345 = vadd.f32 %v343, 1e-06
        %v346 = vrcp.pop %v344
        %v347 = vmul.f32 %v344, %v346
        %v348 = vsub.f32 1.0, %v347
        %v349 = vmul.f32 %v346, %v348
        %v350 = vadd.f32 %v346, %v349
        %vm351 = vweird.f32 %v344
        %vm352 = vweird.f32 %v346
        %vm353 = vmor %vm351, %vm352
        %v354 = vsel %vm353, %v346, %v350
        %v355 = vand.u32 2147483647, %v344
        %vm356 = vcmp.eq.f32.partialorder %v355, 8.507059e+37
        %v357 = vand.u32 %v344, 2147483648
        %v358 = vor.u32 1.1754944e-38, %v357
        %v359 = vsel %vm356, %v358, %v354
        %v360 = vmul.f32 1.0, %v359
        %v361 = vrcp.pop %v345
        %v362 = vmul.f32 %v345, %v361
        %v363 = vsub.f32 1.0, %v362
        %v364 = vmul.f32 %v361, %v363
        %v365 = vadd.f32 %v361, %v364
        %vm366 = vweird.f32 %v345
        %vm367 = vweird.f32 %v361
        %vm368 = vmor %vm366, %vm367
        %v369 = vsel %vm368, %v361, %v365
        %v370 = vand.u32 2147483647, %v345
        %vm371 = vcmp.eq.f32.partialorder %v370, 8.507059e+37
        %v372 = vand.u32 %v345, 2147483648
        %v373 = vor.u32 1.1754944e-38, %v372
        %v374 = vsel %vm371, %v373, %v369
        %v375 = vmul.f32 1.0, %v374
        %v376 = vmul.f32 %v360, %v336
        %v377 = vmul.f32 %v375, %v336
        %378 = vset.pattern.permute.xlu0 1
        %379 = vperm.xlu0 %378, %v272
        %v380 = vpop.permute.xlu0 %379
        %382 = vset.pattern.permute.xlu0 1
        %383 = vperm.xlu0 %382, %v273
        %v384 = vpop.permute.xlu0 %383
        %v386 = vmul.f32 %v289, %v380
        %v387 = vmul.f32 %v290, %v384
        %v388 = vadd.f32 %v386, 1e-06
        %v389 = vadd.f32 %v387, 1e-06
        %v390 = vlog2.pop %v388
        %v391 = vmul.f32 %v390, 0.6931472
        %v392 = vlog2.pop %v389
        %v393 = vmul.f32 %v392, 0.6931472
        %v394 = vand.u32 2147483647, %v391
        %v395 = vand.u32 2147483647, %v393
        %v396 = vadd.f32 %v394, 1e-06
        %v397 = vadd.f32 %v395, 1e-06
        %v398 = vrcp.pop %v396
        %v399 = vmul.f32 %v396, %v398
        %v400 = vsub.f32 1.0, %v399
        %v401 = vmul.f32 %v398, %v400
        %v402 = vadd.f32 %v398, %v401
        %vm403 = vweird.f32 %v396
        %vm404 = vweird.f32 %v398
        %vm405 = vmor %vm403, %vm404
        %v406 = vsel %vm405, %v398, %v402
        %v407 = vand.u32 2147483647, %v396
        %vm408 = vcmp.eq.f32.partialorder %v407, 8.507059e+37
        %v409 = vand.u32 %v396, 2147483648
        %v410 = vor.u32 1.1754944e-38, %v409
        %v411 = vsel %vm408, %v410, %v406
        %v412 = vmul.f32 1.0, %v411
        %v413 = vrcp.pop %v397
        %v414 = vmul.f32 %v397, %v413
        %v415 = vsub.f32 1.0, %v414
        %v416 = vmul.f32 %v413, %v415
        %v417 = vadd.f32 %v413, %v416
        %vm418 = vweird.f32 %v397
        %vm419 = vweird.f32 %v413
        %vm420 = vmor %vm418, %vm419
        %v421 = vsel %vm420, %v413, %v417
        %v422 = vand.u32 2147483647, %v397
        %vm423 = vcmp.eq.f32.partialorder %v422, 8.507059e+37
        %v424 = vand.u32 %v397, 2147483648
        %v425 = vor.u32 1.1754944e-38, %v424
        %v426 = vsel %vm423, %v425, %v421
        %v427 = vmul.f32 1.0, %v426
        %v428 = vld [vmem:[%s6] sm:$0xff]
        %v429 = vld [vmem:[%s6 + $0x8] sm:$0x3]
        %vm430 = vcmask 80896
        %v432 = vsel %vm430, %v428, 0
        %v435 = vsel %vm430, %v429, 0
        %vm437 = vcmask 1041408
        %v439 = vsel %vm437, %v427, 0
        %441 = vmatpush.msra.mxu0 0.0
        %442 = vmatpush.msra.mxu0 0.0
        %443 = vmatpush.msra.mxu0 0.0
        %444 = vmatpush.msra.mxu0 0.0
        %445 = vmatpush.msra.mxu0 0.0
        %446 = vmatpush.msra.mxu0 0.0
        %447 = vmatpush.msra.mxu0 0.0
        %448 = vmatpush.msra.mxu0 0.0
        %449 = vmatpush.msra.mxu0 0.0
        %450 = vmatpush.msra.mxu0 0.0
        %451 = vmatpush.msra.mxu0 0.0
        %452 = vmatpush.msra.mxu0 0.0
        %453 = vmatpush.msra.mxu0 0.0
        %454 = vmatpush.msra.mxu0 0.0
        %v455 = vand.u32 %v439, 4294901760
        %456 = vmatpush.msra.mxu0 %v455
        %v457 = vand.u32 %v412, 4294901760
        %458 = vmatpush.msra.mxu0 %v457
        %v459 = vand.u32 %v432, 4294901760
        %v460 = vsub.f32 %v432, %v459
        %v461 = vand.u32 %v460, 4294901760
        %v462 = vsub.f32 %v460, %v461
        %v463 = vand.u32 %v462, 4294901760
        %464 = vmatmul.f32.gmra.mxu0 %v463
        %v465 = vpop.f32.mrf.mxu0
        %v466 = vadd.f32 0.0, %v465
        %v467 = vand.u32 %v435, 4294901760
        %v468 = vsub.f32 %v435, %v467
        %v469 = vand.u32 %v468, 4294901760
        %v470 = vsub.f32 %v468, %v469
        %v471 = vand.u32 %v470, 4294901760
        %472 = vmatmul.f32.gmra.mxu0 %v471
        %v473 = vpop.f32.mrf.mxu0
        %v474 = vadd.f32 0.0, %v473
        %475 = vdwg.mxu0
        %476 = vmatpush.msra.mxu0 0.0
        %477 = vmatpush.msra.mxu0 0.0
        %478 = vmatpush.msra.mxu0 0.0
        %479 = vmatpush.msra.mxu0 0.0
        %480 = vmatpush.msra.mxu0 0.0
        %481 = vmatpush.msra.mxu0 0.0
        %482 = vmatpush.msra.mxu0 0.0
        %483 = vmatpush.msra.mxu0 0.0
        %484 = vmatpush.msra.mxu0 0.0
        %485 = vmatpush.msra.mxu0 0.0
        %486 = vmatpush.msra.mxu0 0.0
        %487 = vmatpush.msra.mxu0 0.0
        %488 = vmatpush.msra.mxu0 0.0
        %489 = vmatpush.msra.mxu0 0.0
        %v490 = vand.u32 %v439, 4294901760
        %v491 = vsub.f32 %v439, %v490
        %v492 = vand.u32 %v491, 4294901760
        %v493 = vsub.f32 %v491, %v492
        %v494 = vand.u32 %v493, 4294901760
        %495 = vmatpush.msra.mxu0 %v494
        %v496 = vand.u32 %v412, 4294901760
        %v497 = vsub.f32 %v412, %v496
        %v498 = vand.u32 %v497, 4294901760
        %v499 = vsub.f32 %v497, %v498
        %v500 = vand.u32 %v499, 4294901760
        %501 = vmatpush.msra.mxu0 %v500
        %v502 = vand.u32 %v432, 4294901760
        %503 = vmatmul.f32.gmra.mxu0 %v502
        %v504 = vpop.f32.mrf.mxu0
        %v505 = vadd.f32 %v466, %v504
        %v506 = vand.u32 %v435, 4294901760
        %507 = vmatmul.f32.gmra.mxu0 %v506
        %v508 = vpop.f32.mrf.mxu0
        %v509 = vadd.f32 %v474, %v508
        %510 = vdwg.mxu0
        %511 = vmatpush.msra.mxu0 0.0
        %512 = vmatpush.msra.mxu0 0.0
        %513 = vmatpush.msra.mxu0 0.0
        %514 = vmatpush.msra.mxu0 0.0
        %515 = vmatpush.msra.mxu0 0.0
        %516 = vmatpush.msra.mxu0 0.0
        %517 = vmatpush.msra.mxu0 0.0
        %518 = vmatpush.msra.mxu0 0.0
        %519 = vmatpush.msra.mxu0 0.0
        %520 = vmatpush.msra.mxu0 0.0
        %521 = vmatpush.msra.mxu0 0.0
        %522 = vmatpush.msra.mxu0 0.0
        %523 = vmatpush.msra.mxu0 0.0
        %524 = vmatpush.msra.mxu0 0.0
        %v525 = vand.u32 %v439, 4294901760
        %v526 = vsub.f32 %v439, %v525
        %527 = vmatpush.msra.mxu0 %v526
        %v528 = vand.u32 %v412, 4294901760
        %v529 = vsub.f32 %v412, %v528
        %530 = vmatpush.msra.mxu0 %v529
        %v531 = vand.u32 %v432, 4294901760
        %v532 = vsub.f32 %v432, %v531
        %533 = vmatmul.f32.gmra.mxu0 %v532
        %v534 = vpop.f32.mrf.mxu0
        %v535 = vadd.f32 %v505, %v534
        %v536 = vand.u32 %v435, 4294901760
        %v537 = vsub.f32 %v435, %v536
        %538 = vmatmul.f32.gmra.mxu0 %v537
        %v539 = vpop.f32.mrf.mxu0
        %v540 = vadd.f32 %v509, %v539
        %541 = vdwg.mxu0
        %542 = vmatpush.msra.mxu0 0.0
        %543 = vmatpush.msra.mxu0 0.0
        %544 = vmatpush.msra.mxu0 0.0
        %545 = vmatpush.msra.mxu0 0.0
        %546 = vmatpush.msra.mxu0 0.0
        %547 = vmatpush.msra.mxu0 0.0
        %548 = vmatpush.msra.mxu0 0.0
        %549 = vmatpush.msra.mxu0 0.0
        %550 = vmatpush.msra.mxu0 0.0
        %551 = vmatpush.msra.mxu0 0.0
        %552 = vmatpush.msra.mxu0 0.0
        %553 = vmatpush.msra.mxu0 0.0
        %554 = vmatpush.msra.mxu0 0.0
        %555 = vmatpush.msra.mxu0 0.0
        %v556 = vand.u32 %v439, 4294901760
        %557 = vmatpush.msra.mxu0 %v556
        %v558 = vand.u32 %v412, 4294901760
        %559 = vmatpush.msra.mxu0 %v558
        %v560 = vand.u32 %v432, 4294901760
        %v561 = vsub.f32 %v432, %v560
        %v562 = vand.u32 %v561, 4294901760
        %563 = vmatmul.f32.gmra.mxu0 %v562
        %v564 = vpop.f32.mrf.mxu0
        %v565 = vadd.f32 %v535, %v564
        %v566 = vand.u32 %v435, 4294901760
        %v567 = vsub.f32 %v435, %v566
        %v568 = vand.u32 %v567, 4294901760
        %569 = vmatmul.f32.gmra.mxu0 %v568
        %v570 = vpop.f32.mrf.mxu0
        %v571 = vadd.f32 %v540, %v570
        %572 = vdwg.mxu0
        %573 = vmatpush.msra.mxu0 0.0
        %574 = vmatpush.msra.mxu0 0.0
        %575 = vmatpush.msra.mxu0 0.0
        %576 = vmatpush.msra.mxu0 0.0
        %577 = vmatpush.msra.mxu0 0.0
        %578 = vmatpush.msra.mxu0 0.0
        %579 = vmatpush.msra.mxu0 0.0
        %580 = vmatpush.msra.mxu0 0.0
        %581 = vmatpush.msra.mxu0 0.0
        %582 = vmatpush.msra.mxu0 0.0
        %583 = vmatpush.msra.mxu0 0.0
        %584 = vmatpush.msra.mxu0 0.0
        %585 = vmatpush.msra.mxu0 0.0
        %586 = vmatpush.msra.mxu0 0.0
        %v587 = vand.u32 %v439, 4294901760
        %v588 = vsub.f32 %v439, %v587
        %v589 = vand.u32 %v588, 4294901760
        %590 = vmatpush.msra.mxu0 %v589
        %v591 = vand.u32 %v412, 4294901760
        %v592 = vsub.f32 %v412, %v591
        %v593 = vand.u32 %v592, 4294901760
        %594 = vmatpush.msra.mxu0 %v593
        %v595 = vand.u32 %v432, 4294901760
        %596 = vmatmul.f32.gmra.mxu0 %v595
        %v597 = vpop.f32.mrf.mxu0
        %v598 = vadd.f32 %v565, %v597
        %v599 = vand.u32 %v435, 4294901760
        %600 = vmatmul.f32.gmra.mxu0 %v599
        %v601 = vpop.f32.mrf.mxu0
        %v602 = vadd.f32 %v571, %v601
        %603 = vdwg.mxu0
        %604 = vmatpush.msra.mxu0 0.0
        %605 = vmatpush.msra.mxu0 0.0
        %606 = vmatpush.msra.mxu0 0.0
        %607 = vmatpush.msra.mxu0 0.0
        %608 = vmatpush.msra.mxu0 0.0
        %609 = vmatpush.msra.mxu0 0.0
        %610 = vmatpush.msra.mxu0 0.0
        %611 = vmatpush.msra.mxu0 0.0
        %612 = vmatpush.msra.mxu0 0.0
        %613 = vmatpush.msra.mxu0 0.0
        %614 = vmatpush.msra.mxu0 0.0
        %615 = vmatpush.msra.mxu0 0.0
        %616 = vmatpush.msra.mxu0 0.0
        %617 = vmatpush.msra.mxu0 0.0
        %v618 = vand.u32 %v439, 4294901760
        %619 = vmatpush.msra.mxu0 %v618
        %v620 = vand.u32 %v412, 4294901760
        %621 = vmatpush.msra.mxu0 %v620
        %v622 = vand.u32 %v432, 4294901760
        %623 = vmatmul.f32.gmra.mxu0 %v622
        %v624 = vpop.f32.mrf.mxu0
        %v625 = vadd.f32 %v598, %v624
        %v626 = vand.u32 %v435, 4294901760
        %627 = vmatmul.f32.gmra.mxu0 %v626
        %v628 = vpop.f32.mrf.mxu0
        %v629 = vadd.f32 %v602, %v628
        %630 = vdwg.mxu0
        %v631 = vrcp.pop %v625
        %v632 = vmul.f32 %v625, %v631
        %v633 = vsub.f32 1.0, %v632
        %v634 = vmul.f32 %v631, %v633
        %v635 = vadd.f32 %v631, %v634
        %vm636 = vweird.f32 %v625
        %vm637 = vweird.f32 %v631
        %vm638 = vmor %vm636, %vm637
        %v639 = vsel %vm638, %v631, %v635
        %v640 = vand.u32 2147483647, %v625
        %vm641 = vcmp.eq.f32.partialorder %v640, 8.507059e+37
        %v642 = vand.u32 %v625, 2147483648
        %v643 = vor.u32 1.1754944e-38, %v642
        %v644 = vsel %vm641, %v643, %v639
        %v645 = vrcp.pop %v629
        %v646 = vmul.f32 %v629, %v645
        %v647 = vsub.f32 1.0, %v646
        %v648 = vmul.f32 %v645, %v647
        %v649 = vadd.f32 %v645, %v648
        %vm650 = vweird.f32 %v629
        %vm651 = vweird.f32 %v645
        %vm652 = vmor %vm650, %vm651
        %v653 = vsel %vm652, %v645, %v649
        %v654 = vand.u32 2147483647, %v629
        %vm655 = vcmp.eq.f32.partialorder %v654, 8.507059e+37
        %v656 = vand.u32 %v629, 2147483648
        %v657 = vor.u32 1.1754944e-38, %v656
        %v658 = vsel %vm655, %v657, %v653
        %v659 = vmul.f32 %v412, %v644
        %v660 = vmul.f32 %v427, %v658
        %v661 = vmul.f32 %v287, %v287
        %v662 = vmul.f32 %v288, %v288
        %663 = vset.pattern.permute.xlu0 2
        %664 = vperm.xlu0 %663, %v272
        %v665 = vpop.permute.xlu0 %664
        %667 = vset.pattern.permute.xlu0 2
        %668 = vperm.xlu0 %667, %v273
        %v669 = vpop.permute.xlu0 %668
        %v671 = vmul.f32 %v661, %v665
        %v672 = vmul.f32 %v662, %v669
        %v673 = vmul.f32 %v287, 2.0
        %v674 = vmul.f32 %v288, 2.0
        %675 = vset.pattern.permute.xlu0 3
        %676 = vperm.xlu0 %675, %v272
        %v677 = vpop.permute.xlu0 %676
        %679 = vset.pattern.permute.xlu0 3
        %680 = vperm.xlu0 %679, %v273
        %v681 = vpop.permute.xlu0 %680
        %v683 = vmul.f32 %v673, %v677
        %v684 = vmul.f32 %v674, %v681
        %v685 = vadd.f32 %v671, %v683
        %v686 = vadd.f32 %v672, %v684
        %687 = vset.pattern.permute.xlu0 4
        %688 = vperm.xlu0 %687, %v272
        %v689 = vpop.permute.xlu0 %688
        %691 = vset.pattern.permute.xlu0 4
        %692 = vperm.xlu0 %691, %v273
        %v693 = vpop.permute.xlu0 %692
        %v695 = vadd.f32 %v685, %v689
        %v696 = vadd.f32 %v686, %v693
        %v697 = vadd.f32 %v695, 1e-05
        %v698 = vadd.f32 %v696, 1e-05
        %v699 = vrsqrt.pop %v697
        %v700 = vmul.f32 %v699, %v697
        %v701 = vmul.f32 %v700, %v699
        %v702 = vmul.f32 0.5, %v701
        %v703 = vsub.f32 1.5, %v702
        %v704 = vmul.f32 %v699, %v703
        %vm705 = vweird.f32 %v697
        %vm706 = vweird.f32 %v699
        %vm707 = vmor %vm705, %vm706
        %v708 = vsel %vm707, %v699, %v704
        %v709 = vrsqrt.pop %v698
        %v710 = vmul.f32 %v709, %v698
        %v711 = vmul.f32 %v710, %v709
        %v712 = vmul.f32 0.5, %v711
        %v713 = vsub.f32 1.5, %v712
        %v714 = vmul.f32 %v709, %v713
        %vm715 = vweird.f32 %v698
        %vm716 = vweird.f32 %v709
        %vm717 = vmor %vm715, %vm716
        %v718 = vsel %vm717, %v709, %v714
        %v719 = vmul.f32 %v708, %v659
        %v720 = vmul.f32 %v718, %v660
        %v721 = vmul.f32 %v719, %v376
        %v722 = vmul.f32 %v720, %v377
        %v723 = vmul.f32 %v721, %v287
        %v724 = vmul.f32 %v722, %v288
        %v725 = vld [vmem:[%s3] sm:$0xff]
        %v726 = vld [vmem:[%s3 + $0x8] sm:$0xff]
        %v727 = vld [vmem:[%s3 + $0x10] sm:$0xff]
        %v728 = vld [vmem:[%s3 + $0x18] sm:$0xff]
        %v729 = vld [vmem:[%s4] sm:$0xff]
        %v730 = vld [vmem:[%s4 + $0x8] sm:$0xff]
        %v731 = vld [vmem:[%s4 + $0x10] sm:$0xff]
        %v732 = vld [vmem:[%s4 + $0x18] sm:$0xff]
        %v734 = vsel %vm430, %v729, 0
        %v737 = vsel %vm430, %v730, 0
        %v740 = vsel %vm430, %v731, 0
        %v743 = vsel %vm430, %v732, 0
        %v746 = vsel %vm437, %v722, 0
        %748 = vmatpush.msra.mxu0 0.0
        %749 = vmatpush.msra.mxu0 0.0
        %750 = vmatpush.msra.mxu0 0.0
        %751 = vmatpush.msra.mxu0 0.0
        %752 = vmatpush.msra.mxu0 0.0
        %753 = vmatpush.msra.mxu0 0.0
        %754 = vmatpush.msra.mxu0 0.0
        %755 = vmatpush.msra.mxu0 0.0
        %756 = vmatpush.msra.mxu0 0.0
        %757 = vmatpush.msra.mxu0 0.0
        %758 = vmatpush.msra.mxu0 0.0
        %759 = vmatpush.msra.mxu0 0.0
        %760 = vmatpush.msra.mxu0 0.0
        %761 = vmatpush.msra.mxu0 0.0
        %v762 = vand.u32 %v746, 4294901760
        %763 = vmatpush.msra.mxu0 %v762
        %v764 = vand.u32 %v721, 4294901760
        %765 = vmatpush.msra.mxu0 %v764
        %v766 = vand.u32 %v734, 4294901760
        %v767 = vsub.f32 %v734, %v766
        %v768 = vand.u32 %v767, 4294901760
        %v769 = vsub.f32 %v767, %v768
        %v770 = vand.u32 %v769, 4294901760
        %771 = vmatmul.f32.gmra.mxu0 %v770
        %v772 = vpop.f32.mrf.mxu0
        %v773 = vadd.f32 0.0, %v772
        %v774 = vand.u32 %v737, 4294901760
        %v775 = vsub.f32 %v737, %v774
        %v776 = vand.u32 %v775, 4294901760
        %v777 = vsub.f32 %v775, %v776
        %v778 = vand.u32 %v777, 4294901760
        %779 = vmatmul.f32.gmra.mxu0 %v778
        %v780 = vpop.f32.mrf.mxu0
        %v781 = vadd.f32 0.0, %v780
        %v782 = vand.u32 %v740, 4294901760
        %v783 = vsub.f32 %v740, %v782
        %v784 = vand.u32 %v783, 4294901760
        %v785 = vsub.f32 %v783, %v784
        %v786 = vand.u32 %v785, 4294901760
        %787 = vmatmul.f32.gmra.mxu0 %v786
        %v788 = vpop.f32.mrf.mxu0
        %v789 = vadd.f32 0.0, %v788
        %v790 = vand.u32 %v743, 4294901760
        %v791 = vsub.f32 %v743, %v790
        %v792 = vand.u32 %v791, 4294901760
        %v793 = vsub.f32 %v791, %v792
        %v794 = vand.u32 %v793, 4294901760
        %795 = vmatmul.f32.gmra.mxu0 %v794
        %v796 = vpop.f32.mrf.mxu0
        %v797 = vadd.f32 0.0, %v796
        %798 = vdwg.mxu0
        %799 = vmatpush.msra.mxu0 0.0
        %800 = vmatpush.msra.mxu0 0.0
        %801 = vmatpush.msra.mxu0 0.0
        %802 = vmatpush.msra.mxu0 0.0
        %803 = vmatpush.msra.mxu0 0.0
        %804 = vmatpush.msra.mxu0 0.0
        %805 = vmatpush.msra.mxu0 0.0
        %806 = vmatpush.msra.mxu0 0.0
        %807 = vmatpush.msra.mxu0 0.0
        %808 = vmatpush.msra.mxu0 0.0
        %809 = vmatpush.msra.mxu0 0.0
        %810 = vmatpush.msra.mxu0 0.0
        %811 = vmatpush.msra.mxu0 0.0
        %812 = vmatpush.msra.mxu0 0.0
        %v813 = vand.u32 %v746, 4294901760
        %v814 = vsub.f32 %v746, %v813
        %v815 = vand.u32 %v814, 4294901760
        %v816 = vsub.f32 %v814, %v815
        %v817 = vand.u32 %v816, 4294901760
        %818 = vmatpush.msra.mxu0 %v817
        %v819 = vand.u32 %v721, 4294901760
        %v820 = vsub.f32 %v721, %v819
        %v821 = vand.u32 %v820, 4294901760
        %v822 = vsub.f32 %v820, %v821
        %v823 = vand.u32 %v822, 4294901760
        %824 = vmatpush.msra.mxu0 %v823
        %v825 = vand.u32 %v734, 4294901760
        %826 = vmatmul.f32.gmra.mxu0 %v825
        %v827 = vpop.f32.mrf.mxu0
        %v828 = vadd.f32 %v773, %v827
        %v829 = vand.u32 %v737, 4294901760
        %830 = vmatmul.f32.gmra.mxu0 %v829
        %v831 = vpop.f32.mrf.mxu0
        %v832 = vadd.f32 %v781, %v831
        %v833 = vand.u32 %v740, 4294901760
        %834 = vmatmul.f32.gmra.mxu0 %v833
        %v835 = vpop.f32.mrf.mxu0
        %v836 = vadd.f32 %v789, %v835
        %v837 = vand.u32 %v743, 4294901760
        %838 = vmatmul.f32.gmra.mxu0 %v837
        %v839 = vpop.f32.mrf.mxu0
        %v840 = vadd.f32 %v797, %v839
        %841 = vdwg.mxu0
        %842 = vmatpush.msra.mxu0 0.0
        %843 = vmatpush.msra.mxu0 0.0
        %844 = vmatpush.msra.mxu0 0.0
        %845 = vmatpush.msra.mxu0 0.0
        %846 = vmatpush.msra.mxu0 0.0
        %847 = vmatpush.msra.mxu0 0.0
        %848 = vmatpush.msra.mxu0 0.0
        %849 = vmatpush.msra.mxu0 0.0
        %850 = vmatpush.msra.mxu0 0.0
        %851 = vmatpush.msra.mxu0 0.0
        %852 = vmatpush.msra.mxu0 0.0
        %853 = vmatpush.msra.mxu0 0.0
        %854 = vmatpush.msra.mxu0 0.0
        %855 = vmatpush.msra.mxu0 0.0
        %v856 = vand.u32 %v746, 4294901760
        %v857 = vsub.f32 %v746, %v856
        %858 = vmatpush.msra.mxu0 %v857
        %v859 = vand.u32 %v721, 4294901760
        %v860 = vsub.f32 %v721, %v859
        %861 = vmatpush.msra.mxu0 %v860
        %v862 = vand.u32 %v734, 4294901760
        %v863 = vsub.f32 %v734, %v862
        %864 = vmatmul.f32.gmra.mxu0 %v863
        %v865 = vpop.f32.mrf.mxu0
        %v866 = vadd.f32 %v828, %v865
        %v867 = vand.u32 %v737, 4294901760
        %v868 = vsub.f32 %v737, %v867
        %869 = vmatmul.f32.gmra.mxu0 %v868
        %v870 = vpop.f32.mrf.mxu0
        %v871 = vadd.f32 %v832, %v870
        %v872 = vand.u32 %v740, 4294901760
        %v873 = vsub.f32 %v740, %v872
        %874 = vmatmul.f32.gmra.mxu0 %v873
        %v875 = vpop.f32.mrf.mxu0
        %v876 = vadd.f32 %v836, %v875
        %v877 = vand.u32 %v743, 4294901760
        %v878 = vsub.f32 %v743, %v877
        %879 = vmatmul.f32.gmra.mxu0 %v878
        %v880 = vpop.f32.mrf.mxu0
        %v881 = vadd.f32 %v840, %v880
        %882 = vdwg.mxu0
        %883 = vmatpush.msra.mxu0 0.0
        %884 = vmatpush.msra.mxu0 0.0
        %885 = vmatpush.msra.mxu0 0.0
        %886 = vmatpush.msra.mxu0 0.0
        %887 = vmatpush.msra.mxu0 0.0
        %888 = vmatpush.msra.mxu0 0.0
        %889 = vmatpush.msra.mxu0 0.0
        %890 = vmatpush.msra.mxu0 0.0
        %891 = vmatpush.msra.mxu0 0.0
        %892 = vmatpush.msra.mxu0 0.0
        %893 = vmatpush.msra.mxu0 0.0
        %894 = vmatpush.msra.mxu0 0.0
        %895 = vmatpush.msra.mxu0 0.0
        %896 = vmatpush.msra.mxu0 0.0
        %v897 = vand.u32 %v746, 4294901760
        %898 = vmatpush.msra.mxu0 %v897
        %v899 = vand.u32 %v721, 4294901760
        %900 = vmatpush.msra.mxu0 %v899
        %v901 = vand.u32 %v734, 4294901760
        %v902 = vsub.f32 %v734, %v901
        %v903 = vand.u32 %v902, 4294901760
        %904 = vmatmul.f32.gmra.mxu0 %v903
        %v905 = vpop.f32.mrf.mxu0
        %v906 = vadd.f32 %v866, %v905
        %v907 = vand.u32 %v737, 4294901760
        %v908 = vsub.f32 %v737, %v907
        %v909 = vand.u32 %v908, 4294901760
        %910 = vmatmul.f32.gmra.mxu0 %v909
        %v911 = vpop.f32.mrf.mxu0
        %v912 = vadd.f32 %v871, %v911
        %v913 = vand.u32 %v740, 4294901760
        %v914 = vsub.f32 %v740, %v913
        %v915 = vand.u32 %v914, 4294901760
        %916 = vmatmul.f32.gmra.mxu0 %v915
        %v917 = vpop.f32.mrf.mxu0
        %v918 = vadd.f32 %v876, %v917
        %v919 = vand.u32 %v743, 4294901760
        %v920 = vsub.f32 %v743, %v919
        %v921 = vand.u32 %v920, 4294901760
        %922 = vmatmul.f32.gmra.mxu0 %v921
        %v923 = vpop.f32.mrf.mxu0
        %v924 = vadd.f32 %v881, %v923
        %925 = vdwg.mxu0
        %926 = vmatpush.msra.mxu0 0.0
        %927 = vmatpush.msra.mxu0 0.0
        %928 = vmatpush.msra.mxu0 0.0
        %929 = vmatpush.msra.mxu0 0.0
        %930 = vmatpush.msra.mxu0 0.0
        %931 = vmatpush.msra.mxu0 0.0
        %932 = vmatpush.msra.mxu0 0.0
        %933 = vmatpush.msra.mxu0 0.0
        %934 = vmatpush.msra.mxu0 0.0
        %935 = vmatpush.msra.mxu0 0.0
        %936 = vmatpush.msra.mxu0 0.0
        %937 = vmatpush.msra.mxu0 0.0
        %938 = vmatpush.msra.mxu0 0.0
        %939 = vmatpush.msra.mxu0 0.0
        %v940 = vand.u32 %v746, 4294901760
        %v941 = vsub.f32 %v746, %v940
        %v942 = vand.u32 %v941, 4294901760
        %943 = vmatpush.msra.mxu0 %v942
        %v944 = vand.u32 %v721, 4294901760
        %v945 = vsub.f32 %v721, %v944
        %v946 = vand.u32 %v945, 4294901760
        %947 = vmatpush.msra.mxu0 %v946
        %v948 = vand.u32 %v734, 4294901760
        %949 = vmatmul.f32.gmra.mxu0 %v948
        %v950 = vpop.f32.mrf.mxu0
        %v951 = vadd.f32 %v906, %v950
        %v952 = vand.u32 %v737, 4294901760
        %953 = vmatmul.f32.gmra.mxu0 %v952
        %v954 = vpop.f32.mrf.mxu0
        %v955 = vadd.f32 %v912, %v954
        %v956 = vand.u32 %v740, 4294901760
        %957 = vmatmul.f32.gmra.mxu0 %v956
        %v958 = vpop.f32.mrf.mxu0
        %v959 = vadd.f32 %v918, %v958
        %v960 = vand.u32 %v743, 4294901760
        %961 = vmatmul.f32.gmra.mxu0 %v960
        %v962 = vpop.f32.mrf.mxu0
        %v963 = vadd.f32 %v924, %v962
        %964 = vdwg.mxu0
        %965 = vmatpush.msra.mxu0 0.0
        %966 = vmatpush.msra.mxu0 0.0
        %967 = vmatpush.msra.mxu0 0.0
        %968 = vmatpush.msra.mxu0 0.0
        %969 = vmatpush.msra.mxu0 0.0
        %970 = vmatpush.msra.mxu0 0.0
        %971 = vmatpush.msra.mxu0 0.0
        %972 = vmatpush.msra.mxu0 0.0
        %973 = vmatpush.msra.mxu0 0.0
        %974 = vmatpush.msra.mxu0 0.0
        %975 = vmatpush.msra.mxu0 0.0
        %976 = vmatpush.msra.mxu0 0.0
        %977 = vmatpush.msra.mxu0 0.0
        %978 = vmatpush.msra.mxu0 0.0
        %v979 = vand.u32 %v746, 4294901760
        %980 = vmatpush.msra.mxu0 %v979
        %v981 = vand.u32 %v721, 4294901760
        %982 = vmatpush.msra.mxu0 %v981
        %v983 = vand.u32 %v734, 4294901760
        %984 = vmatmul.f32.gmra.mxu0 %v983
        %v985 = vpop.f32.mrf.mxu0
        %v986 = vadd.f32 %v951, %v985
        %v987 = vand.u32 %v737, 4294901760
        %988 = vmatmul.f32.gmra.mxu0 %v987
        %v989 = vpop.f32.mrf.mxu0
        %v990 = vadd.f32 %v955, %v989
        %v991 = vand.u32 %v740, 4294901760
        %992 = vmatmul.f32.gmra.mxu0 %v991
        %v993 = vpop.f32.mrf.mxu0
        %v994 = vadd.f32 %v959, %v993
        %v995 = vand.u32 %v743, 4294901760
        %996 = vmatmul.f32.gmra.mxu0 %v995
        %v997 = vpop.f32.mrf.mxu0
        %v998 = vadd.f32 %v963, %v997
        %999 = vdwg.mxu0
        %v1001 = vsel %vm430, %v725, 0
        %v1004 = vsel %vm430, %v726, 0
        %v1007 = vsel %vm430, %v727, 0
        %v1010 = vsel %vm430, %v728, 0
        %v1013 = vsel %vm437, %v724, 0
        %1015 = vmatpush.msra.mxu0 0.0
        %1016 = vmatpush.msra.mxu0 0.0
        %1017 = vmatpush.msra.mxu0 0.0
        %1018 = vmatpush.msra.mxu0 0.0
        %1019 = vmatpush.msra.mxu0 0.0
        %1020 = vmatpush.msra.mxu0 0.0
        %1021 = vmatpush.msra.mxu0 0.0
        %1022 = vmatpush.msra.mxu0 0.0
        %1023 = vmatpush.msra.mxu0 0.0
        %1024 = vmatpush.msra.mxu0 0.0
        %1025 = vmatpush.msra.mxu0 0.0
        %1026 = vmatpush.msra.mxu0 0.0
        %1027 = vmatpush.msra.mxu0 0.0
        %1028 = vmatpush.msra.mxu0 0.0
        %v1029 = vand.u32 %v1013, 4294901760
        %1030 = vmatpush.msra.mxu0 %v1029
        %v1031 = vand.u32 %v723, 4294901760
        %1032 = vmatpush.msra.mxu0 %v1031
        %v1033 = vand.u32 %v1001, 4294901760
        %v1034 = vsub.f32 %v1001, %v1033
        %v1035 = vand.u32 %v1034, 4294901760
        %v1036 = vsub.f32 %v1034, %v1035
        %v1037 = vand.u32 %v1036, 4294901760
        %1038 = vmatmul.f32.gmra.mxu0 %v1037
        %v1039 = vpop.f32.mrf.mxu0
        %v1040 = vadd.f32 %v986, %v1039
        %v1041 = vand.u32 %v1004, 4294901760
        %v1042 = vsub.f32 %v1004, %v1041
        %v1043 = vand.u32 %v1042, 4294901760
        %v1044 = vsub.f32 %v1042, %v1043
        %v1045 = vand.u32 %v1044, 4294901760
        %1046 = vmatmul.f32.gmra.mxu0 %v1045
        %v1047 = vpop.f32.mrf.mxu0
        %v1048 = vadd.f32 %v990, %v1047
        %v1049 = vand.u32 %v1007, 4294901760
        %v1050 = vsub.f32 %v1007, %v1049
        %v1051 = vand.u32 %v1050, 4294901760
        %v1052 = vsub.f32 %v1050, %v1051
        %v1053 = vand.u32 %v1052, 4294901760
        %1054 = vmatmul.f32.gmra.mxu0 %v1053
        %v1055 = vpop.f32.mrf.mxu0
        %v1056 = vadd.f32 %v994, %v1055
        %v1057 = vand.u32 %v1010, 4294901760
        %v1058 = vsub.f32 %v1010, %v1057
        %v1059 = vand.u32 %v1058, 4294901760
        %v1060 = vsub.f32 %v1058, %v1059
        %v1061 = vand.u32 %v1060, 4294901760
        %1062 = vmatmul.f32.gmra.mxu0 %v1061
        %v1063 = vpop.f32.mrf.mxu0
        %v1064 = vadd.f32 %v998, %v1063
        %1065 = vdwg.mxu0
        %1066 = vmatpush.msra.mxu0 0.0
        %1067 = vmatpush.msra.mxu0 0.0
        %1068 = vmatpush.msra.mxu0 0.0
        %1069 = vmatpush.msra.mxu0 0.0
        %1070 = vmatpush.msra.mxu0 0.0
        %1071 = vmatpush.msra.mxu0 0.0
        %1072 = vmatpush.msra.mxu0 0.0
        %1073 = vmatpush.msra.mxu0 0.0
        %1074 = vmatpush.msra.mxu0 0.0
        %1075 = vmatpush.msra.mxu0 0.0
        %1076 = vmatpush.msra.mxu0 0.0
        %1077 = vmatpush.msra.mxu0 0.0
        %1078 = vmatpush.msra.mxu0 0.0
        %1079 = vmatpush.msra.mxu0 0.0
        %v1080 = vand.u32 %v1013, 4294901760
        %v1081 = vsub.f32 %v1013, %v1080
        %v1082 = vand.u32 %v1081, 4294901760
        %v1083 = vsub.f32 %v1081, %v1082
        %v1084 = vand.u32 %v1083, 4294901760
        %1085 = vmatpush.msra.mxu0 %v1084
        %v1086 = vand.u32 %v723, 4294901760
        %v1087 = vsub.f32 %v723, %v1086
        %v1088 = vand.u32 %v1087, 4294901760
        %v1089 = vsub.f32 %v1087, %v1088
        %v1090 = vand.u32 %v1089, 4294901760
        %1091 = vmatpush.msra.mxu0 %v1090
        %v1092 = vand.u32 %v1001, 4294901760
        %1093 = vmatmul.f32.gmra.mxu0 %v1092
        %v1094 = vpop.f32.mrf.mxu0
        %v1095 = vadd.f32 %v1040, %v1094
        %v1096 = vand.u32 %v1004, 4294901760
        %1097 = vmatmul.f32.gmra.mxu0 %v1096
        %v1098 = vpop.f32.mrf.mxu0
        %v1099 = vadd.f32 %v1048, %v1098
        %v1100 = vand.u32 %v1007, 4294901760
        %1101 = vmatmul.f32.gmra.mxu0 %v1100
        %v1102 = vpop.f32.mrf.mxu0
        %v1103 = vadd.f32 %v1056, %v1102
        %v1104 = vand.u32 %v1010, 4294901760
        %1105 = vmatmul.f32.gmra.mxu0 %v1104
        %v1106 = vpop.f32.mrf.mxu0
        %v1107 = vadd.f32 %v1064, %v1106
        %1108 = vdwg.mxu0
        %1109 = vmatpush.msra.mxu0 0.0
        %1110 = vmatpush.msra.mxu0 0.0
        %1111 = vmatpush.msra.mxu0 0.0
        %1112 = vmatpush.msra.mxu0 0.0
        %1113 = vmatpush.msra.mxu0 0.0
        %1114 = vmatpush.msra.mxu0 0.0
        %1115 = vmatpush.msra.mxu0 0.0
        %1116 = vmatpush.msra.mxu0 0.0
        %1117 = vmatpush.msra.mxu0 0.0
        %1118 = vmatpush.msra.mxu0 0.0
        %1119 = vmatpush.msra.mxu0 0.0
        %1120 = vmatpush.msra.mxu0 0.0
        %1121 = vmatpush.msra.mxu0 0.0
        %1122 = vmatpush.msra.mxu0 0.0
        %v1123 = vand.u32 %v1013, 4294901760
        %v1124 = vsub.f32 %v1013, %v1123
        %1125 = vmatpush.msra.mxu0 %v1124
        %v1126 = vand.u32 %v723, 4294901760
        %v1127 = vsub.f32 %v723, %v1126
        %1128 = vmatpush.msra.mxu0 %v1127
        %v1129 = vand.u32 %v1001, 4294901760
        %v1130 = vsub.f32 %v1001, %v1129
        %1131 = vmatmul.f32.gmra.mxu0 %v1130
        %v1132 = vpop.f32.mrf.mxu0
        %v1133 = vadd.f32 %v1095, %v1132
        %v1134 = vand.u32 %v1004, 4294901760
        %v1135 = vsub.f32 %v1004, %v1134
        %1136 = vmatmul.f32.gmra.mxu0 %v1135
        %v1137 = vpop.f32.mrf.mxu0
        %v1138 = vadd.f32 %v1099, %v1137
        %v1139 = vand.u32 %v1007, 4294901760
        %v1140 = vsub.f32 %v1007, %v1139
        %1141 = vmatmul.f32.gmra.mxu0 %v1140
        %v1142 = vpop.f32.mrf.mxu0
        %v1143 = vadd.f32 %v1103, %v1142
        %v1144 = vand.u32 %v1010, 4294901760
        %v1145 = vsub.f32 %v1010, %v1144
        %1146 = vmatmul.f32.gmra.mxu0 %v1145
        %v1147 = vpop.f32.mrf.mxu0
        %v1148 = vadd.f32 %v1107, %v1147
        %1149 = vdwg.mxu0
        %1150 = vmatpush.msra.mxu0 0.0
        %1151 = vmatpush.msra.mxu0 0.0
        %1152 = vmatpush.msra.mxu0 0.0
        %1153 = vmatpush.msra.mxu0 0.0
        %1154 = vmatpush.msra.mxu0 0.0
        %1155 = vmatpush.msra.mxu0 0.0
        %1156 = vmatpush.msra.mxu0 0.0
        %1157 = vmatpush.msra.mxu0 0.0
        %1158 = vmatpush.msra.mxu0 0.0
        %1159 = vmatpush.msra.mxu0 0.0
        %1160 = vmatpush.msra.mxu0 0.0
        %1161 = vmatpush.msra.mxu0 0.0
        %1162 = vmatpush.msra.mxu0 0.0
        %1163 = vmatpush.msra.mxu0 0.0
        %v1164 = vand.u32 %v1013, 4294901760
        %1165 = vmatpush.msra.mxu0 %v1164
        %v1166 = vand.u32 %v723, 4294901760
        %1167 = vmatpush.msra.mxu0 %v1166
        %v1168 = vand.u32 %v1001, 4294901760
        %v1169 = vsub.f32 %v1001, %v1168
        %v1170 = vand.u32 %v1169, 4294901760
        %1171 = vmatmul.f32.gmra.mxu0 %v1170
        %v1172 = vpop.f32.mrf.mxu0
        %v1173 = vadd.f32 %v1133, %v1172
        %v1174 = vand.u32 %v1004, 4294901760
        %v1175 = vsub.f32 %v1004, %v1174
        %v1176 = vand.u32 %v1175, 4294901760
        %1177 = vmatmul.f32.gmra.mxu0 %v1176
        %v1178 = vpop.f32.mrf.mxu0
        %v1179 = vadd.f32 %v1138, %v1178
        %v1180 = vand.u32 %v1007, 4294901760
        %v1181 = vsub.f32 %v1007, %v1180
        %v1182 = vand.u32 %v1181, 4294901760
        %1183 = vmatmul.f32.gmra.mxu0 %v1182
        %v1184 = vpop.f32.mrf.mxu0
        %v1185 = vadd.f32 %v1143, %v1184
        %v1186 = vand.u32 %v1010, 4294901760
        %v1187 = vsub.f32 %v1010, %v1186
        %v1188 = vand.u32 %v1187, 4294901760
        %1189 = vmatmul.f32.gmra.mxu0 %v1188
        %v1190 = vpop.f32.mrf.mxu0
        %v1191 = vadd.f32 %v1148, %v1190
        %1192 = vdwg.mxu0
        %1193 = vmatpush.msra.mxu0 0.0
        %1194 = vmatpush.msra.mxu0 0.0
        %1195 = vmatpush.msra.mxu0 0.0
        %1196 = vmatpush.msra.mxu0 0.0
        %1197 = vmatpush.msra.mxu0 0.0
        %1198 = vmatpush.msra.mxu0 0.0
        %1199 = vmatpush.msra.mxu0 0.0
        %1200 = vmatpush.msra.mxu0 0.0
        %1201 = vmatpush.msra.mxu0 0.0
        %1202 = vmatpush.msra.mxu0 0.0
        %1203 = vmatpush.msra.mxu0 0.0
        %1204 = vmatpush.msra.mxu0 0.0
        %1205 = vmatpush.msra.mxu0 0.0
        %1206 = vmatpush.msra.mxu0 0.0
        %v1207 = vand.u32 %v1013, 4294901760
        %v1208 = vsub.f32 %v1013, %v1207
        %v1209 = vand.u32 %v1208, 4294901760
        %1210 = vmatpush.msra.mxu0 %v1209
        %v1211 = vand.u32 %v723, 4294901760
        %v1212 = vsub.f32 %v723, %v1211
        %v1213 = vand.u32 %v1212, 4294901760
        %1214 = vmatpush.msra.mxu0 %v1213
        %v1215 = vand.u32 %v1001, 4294901760
        %1216 = vmatmul.f32.gmra.mxu0 %v1215
        %v1217 = vpop.f32.mrf.mxu0
        %v1218 = vadd.f32 %v1173, %v1217
        %v1219 = vand.u32 %v1004, 4294901760
        %1220 = vmatmul.f32.gmra.mxu0 %v1219
        %v1221 = vpop.f32.mrf.mxu0
        %v1222 = vadd.f32 %v1179, %v1221
        %v1223 = vand.u32 %v1007, 4294901760
        %1224 = vmatmul.f32.gmra.mxu0 %v1223
        %v1225 = vpop.f32.mrf.mxu0
        %v1226 = vadd.f32 %v1185, %v1225
        %v1227 = vand.u32 %v1010, 4294901760
        %1228 = vmatmul.f32.gmra.mxu0 %v1227
        %v1229 = vpop.f32.mrf.mxu0
        %v1230 = vadd.f32 %v1191, %v1229
        %1231 = vdwg.mxu0
        %1232 = vmatpush.msra.mxu0 0.0
        %1233 = vmatpush.msra.mxu0 0.0
        %1234 = vmatpush.msra.mxu0 0.0
        %1235 = vmatpush.msra.mxu0 0.0
        %1236 = vmatpush.msra.mxu0 0.0
        %1237 = vmatpush.msra.mxu0 0.0
        %1238 = vmatpush.msra.mxu0 0.0
        %1239 = vmatpush.msra.mxu0 0.0
        %1240 = vmatpush.msra.mxu0 0.0
        %1241 = vmatpush.msra.mxu0 0.0
        %1242 = vmatpush.msra.mxu0 0.0
        %1243 = vmatpush.msra.mxu0 0.0
        %1244 = vmatpush.msra.mxu0 0.0
        %1245 = vmatpush.msra.mxu0 0.0
        %v1246 = vand.u32 %v1013, 4294901760
        %1247 = vmatpush.msra.mxu0 %v1246
        %v1248 = vand.u32 %v723, 4294901760
        %1249 = vmatpush.msra.mxu0 %v1248
        %v1250 = vand.u32 %v1001, 4294901760
        %1251 = vmatmul.f32.gmra.mxu0 %v1250
        %v1252 = vpop.f32.mrf.mxu0
        %v1253 = vadd.f32 %v1218, %v1252
        %v1254 = vand.u32 %v1004, 4294901760
        %1255 = vmatmul.f32.gmra.mxu0 %v1254
        %v1256 = vpop.f32.mrf.mxu0
        %v1257 = vadd.f32 %v1222, %v1256
        %v1258 = vand.u32 %v1007, 4294901760
        %1259 = vmatmul.f32.gmra.mxu0 %v1258
        %v1260 = vpop.f32.mrf.mxu0
        %v1261 = vadd.f32 %v1226, %v1260
        %v1262 = vand.u32 %v1010, 4294901760
        %1263 = vmatmul.f32.gmra.mxu0 %v1262
        %v1264 = vpop.f32.mrf.mxu0
        %v1265 = vadd.f32 %v1230, %v1264
        %1266 = vdwg.mxu0
        %v1267 = vld [vmem:[%s5] sm:$0xff]
        %v1268 = vld [vmem:[%s5 + $0x8] sm:$0xff]
        %v1269 = vld [vmem:[%s5 + $0x10] sm:$0xff]
        %v1270 = vld [vmem:[%s5 + $0x18] sm:$0xff]
        %vm1271 = vcmask 15360
        %v1273 = vsel %vm1271, %v1267, 0
        %v1276 = vsel %vm1271, %v1268, 0
        %v1279 = vsel %vm1271, %v1269, 0
        %v1282 = vsel %vm1271, %v1270, 0
        %v1285 = vsel %vm437, %v337, 0
        %1287 = vmatpush.msra.mxu0 0.0
        %1288 = vmatpush.msra.mxu0 0.0
        %1289 = vmatpush.msra.mxu0 0.0
        %1290 = vmatpush.msra.mxu0 0.0
        %1291 = vmatpush.msra.mxu0 0.0
        %1292 = vmatpush.msra.mxu0 0.0
        %1293 = vmatpush.msra.mxu0 0.0
        %1294 = vmatpush.msra.mxu0 0.0
        %1295 = vmatpush.msra.mxu0 0.0
        %1296 = vmatpush.msra.mxu0 0.0
        %1297 = vmatpush.msra.mxu0 0.0
        %1298 = vmatpush.msra.mxu0 0.0
        %1299 = vmatpush.msra.mxu0 0.0
        %1300 = vmatpush.msra.mxu0 0.0
        %1301 = vmatpush.msra.mxu0 0.0
        %v1302 = vand.u32 %v1285, 4294901760
        %1303 = vmatpush.msra.mxu0 %v1302
        %v1304 = vand.u32 %v1273, 4294901760
        %v1305 = vsub.f32 %v1273, %v1304
        %v1306 = vand.u32 %v1305, 4294901760
        %v1307 = vsub.f32 %v1305, %v1306
        %v1308 = vand.u32 %v1307, 4294901760
        %1309 = vmatmul.f32.gmra.mxu0 %v1308
        %v1310 = vpop.f32.mrf.mxu0
        %v1311 = vadd.f32 0.0, %v1310
        %v1312 = vand.u32 %v1276, 4294901760
        %v1313 = vsub.f32 %v1276, %v1312
        %v1314 = vand.u32 %v1313, 4294901760
        %v1315 = vsub.f32 %v1313, %v1314
        %v1316 = vand.u32 %v1315, 4294901760
        %1317 = vmatmul.f32.gmra.mxu0 %v1316
        %v1318 = vpop.f32.mrf.mxu0
        %v1319 = vadd.f32 0.0, %v1318
        %v1320 = vand.u32 %v1279, 4294901760
        %v1321 = vsub.f32 %v1279, %v1320
        %v1322 = vand.u32 %v1321, 4294901760
        %v1323 = vsub.f32 %v1321, %v1322
        %v1324 = vand.u32 %v1323, 4294901760
        %1325 = vmatmul.f32.gmra.mxu0 %v1324
        %v1326 = vpop.f32.mrf.mxu0
        %v1327 = vadd.f32 0.0, %v1326
        %v1328 = vand.u32 %v1282, 4294901760
        %v1329 = vsub.f32 %v1282, %v1328
        %v1330 = vand.u32 %v1329, 4294901760
        %v1331 = vsub.f32 %v1329, %v1330
        %v1332 = vand.u32 %v1331, 4294901760
        %1333 = vmatmul.f32.gmra.mxu0 %v1332
        %v1334 = vpop.f32.mrf.mxu0
        %v1335 = vadd.f32 0.0, %v1334
        %1336 = vdwg.mxu0
        %1337 = vmatpush.msra.mxu0 0.0
        %1338 = vmatpush.msra.mxu0 0.0
        %1339 = vmatpush.msra.mxu0 0.0
        %1340 = vmatpush.msra.mxu0 0.0
        %1341 = vmatpush.msra.mxu0 0.0
        %1342 = vmatpush.msra.mxu0 0.0
        %1343 = vmatpush.msra.mxu0 0.0
        %1344 = vmatpush.msra.mxu0 0.0
        %1345 = vmatpush.msra.mxu0 0.0
        %1346 = vmatpush.msra.mxu0 0.0
        %1347 = vmatpush.msra.mxu0 0.0
        %1348 = vmatpush.msra.mxu0 0.0
        %1349 = vmatpush.msra.mxu0 0.0
        %1350 = vmatpush.msra.mxu0 0.0
        %1351 = vmatpush.msra.mxu0 0.0
        %v1352 = vand.u32 %v1285, 4294901760
        %v1353 = vsub.f32 %v1285, %v1352
        %v1354 = vand.u32 %v1353, 4294901760
        %v1355 = vsub.f32 %v1353, %v1354
        %v1356 = vand.u32 %v1355, 4294901760
        %1357 = vmatpush.msra.mxu0 %v1356
        %v1358 = vand.u32 %v1273, 4294901760
        %1359 = vmatmul.f32.gmra.mxu0 %v1358
        %v1360 = vpop.f32.mrf.mxu0
        %v1361 = vadd.f32 %v1311, %v1360
        %v1362 = vand.u32 %v1276, 4294901760
        %1363 = vmatmul.f32.gmra.mxu0 %v1362
        %v1364 = vpop.f32.mrf.mxu0
        %v1365 = vadd.f32 %v1319, %v1364
        %v1366 = vand.u32 %v1279, 4294901760
        %1367 = vmatmul.f32.gmra.mxu0 %v1366
        %v1368 = vpop.f32.mrf.mxu0
        %v1369 = vadd.f32 %v1327, %v1368
        %v1370 = vand.u32 %v1282, 4294901760
        %1371 = vmatmul.f32.gmra.mxu0 %v1370
        %v1372 = vpop.f32.mrf.mxu0
        %v1373 = vadd.f32 %v1335, %v1372
        %1374 = vdwg.mxu0
        %1375 = vmatpush.msra.mxu0 0.0
        %1376 = vmatpush.msra.mxu0 0.0
        %1377 = vmatpush.msra.mxu0 0.0
        %1378 = vmatpush.msra.mxu0 0.0
        %1379 = vmatpush.msra.mxu0 0.0
        %1380 = vmatpush.msra.mxu0 0.0
        %1381 = vmatpush.msra.mxu0 0.0
        %1382 = vmatpush.msra.mxu0 0.0
        %1383 = vmatpush.msra.mxu0 0.0
        %1384 = vmatpush.msra.mxu0 0.0
        %1385 = vmatpush.msra.mxu0 0.0
        %1386 = vmatpush.msra.mxu0 0.0
        %1387 = vmatpush.msra.mxu0 0.0
        %1388 = vmatpush.msra.mxu0 0.0
        %1389 = vmatpush.msra.mxu0 0.0
        %v1390 = vand.u32 %v1285, 4294901760
        %v1391 = vsub.f32 %v1285, %v1390
        %1392 = vmatpush.msra.mxu0 %v1391
        %v1393 = vand.u32 %v1273, 4294901760
        %v1394 = vsub.f32 %v1273, %v1393
        %1395 = vmatmul.f32.gmra.mxu0 %v1394
        %v1396 = vpop.f32.mrf.mxu0
        %v1397 = vadd.f32 %v1361, %v1396
        %v1398 = vand.u32 %v1276, 4294901760
        %v1399 = vsub.f32 %v1276, %v1398
        %1400 = vmatmul.f32.gmra.mxu0 %v1399
        %v1401 = vpop.f32.mrf.mxu0
        %v1402 = vadd.f32 %v1365, %v1401
        %v1403 = vand.u32 %v1279, 4294901760
        %v1404 = vsub.f32 %v1279, %v1403
        %1405 = vmatmul.f32.gmra.mxu0 %v1404
        %v1406 = vpop.f32.mrf.mxu0
        %v1407 = vadd.f32 %v1369, %v1406
        %v1408 = vand.u32 %v1282, 4294901760
        %v1409 = vsub.f32 %v1282, %v1408
        %1410 = vmatmul.f32.gmra.mxu0 %v1409
        %v1411 = vpop.f32.mrf.mxu0
        %v1412 = vadd.f32 %v1373, %v1411
        %1413 = vdwg.mxu0
        %1414 = vmatpush.msra.mxu0 0.0
        %1415 = vmatpush.msra.mxu0 0.0
        %1416 = vmatpush.msra.mxu0 0.0
        %1417 = vmatpush.msra.mxu0 0.0
        %1418 = vmatpush.msra.mxu0 0.0
        %1419 = vmatpush.msra.mxu0 0.0
        %1420 = vmatpush.msra.mxu0 0.0
        %1421 = vmatpush.msra.mxu0 0.0
        %1422 = vmatpush.msra.mxu0 0.0
        %1423 = vmatpush.msra.mxu0 0.0
        %1424 = vmatpush.msra.mxu0 0.0
        %1425 = vmatpush.msra.mxu0 0.0
        %1426 = vmatpush.msra.mxu0 0.0
        %1427 = vmatpush.msra.mxu0 0.0
        %1428 = vmatpush.msra.mxu0 0.0
        %v1429 = vand.u32 %v1285, 4294901760
        %1430 = vmatpush.msra.mxu0 %v1429
        %v1431 = vand.u32 %v1273, 4294901760
        %v1432 = vsub.f32 %v1273, %v1431
        %v1433 = vand.u32 %v1432, 4294901760
        %1434 = vmatmul.f32.gmra.mxu0 %v1433
        %v1435 = vpop.f32.mrf.mxu0
        %v1436 = vadd.f32 %v1397, %v1435
        %v1437 = vand.u32 %v1276, 4294901760
        %v1438 = vsub.f32 %v1276, %v1437
        %v1439 = vand.u32 %v1438, 4294901760
        %1440 = vmatmul.f32.gmra.mxu0 %v1439
        %v1441 = vpop.f32.mrf.mxu0
        %v1442 = vadd.f32 %v1402, %v1441
        %v1443 = vand.u32 %v1279, 4294901760
        %v1444 = vsub.f32 %v1279, %v1443
        %v1445 = vand.u32 %v1444, 4294901760
        %1446 = vmatmul.f32.gmra.mxu0 %v1445
        %v1447 = vpop.f32.mrf.mxu0
        %v1448 = vadd.f32 %v1407, %v1447
        %v1449 = vand.u32 %v1282, 4294901760
        %v1450 = vsub.f32 %v1282, %v1449
        %v1451 = vand.u32 %v1450, 4294901760
        %1452 = vmatmul.f32.gmra.mxu0 %v1451
        %v1453 = vpop.f32.mrf.mxu0
        %v1454 = vadd.f32 %v1412, %v1453
        %1455 = vdwg.mxu0
        %1456 = vmatpush.msra.mxu0 0.0
        %1457 = vmatpush.msra.mxu0 0.0
        %1458 = vmatpush.msra.mxu0 0.0
        %1459 = vmatpush.msra.mxu0 0.0
        %1460 = vmatpush.msra.mxu0 0.0
        %1461 = vmatpush.msra.mxu0 0.0
        %1462 = vmatpush.msra.mxu0 0.0
        %1463 = vmatpush.msra.mxu0 0.0
        %1464 = vmatpush.msra.mxu0 0.0
        %1465 = vmatpush.msra.mxu0 0.0
        %1466 = vmatpush.msra.mxu0 0.0
        %1467 = vmatpush.msra.mxu0 0.0
        %1468 = vmatpush.msra.mxu0 0.0
        %1469 = vmatpush.msra.mxu0 0.0
        %1470 = vmatpush.msra.mxu0 0.0
        %v1471 = vand.u32 %v1285, 4294901760
        %v1472 = vsub.f32 %v1285, %v1471
        %v1473 = vand.u32 %v1472, 4294901760
        %1474 = vmatpush.msra.mxu0 %v1473
        %v1475 = vand.u32 %v1273, 4294901760
        %1476 = vmatmul.f32.gmra.mxu0 %v1475
        %v1477 = vpop.f32.mrf.mxu0
        %v1478 = vadd.f32 %v1436, %v1477
        %v1479 = vand.u32 %v1276, 4294901760
        %1480 = vmatmul.f32.gmra.mxu0 %v1479
        %v1481 = vpop.f32.mrf.mxu0
        %v1482 = vadd.f32 %v1442, %v1481
        %v1483 = vand.u32 %v1279, 4294901760
        %1484 = vmatmul.f32.gmra.mxu0 %v1483
        %v1485 = vpop.f32.mrf.mxu0
        %v1486 = vadd.f32 %v1448, %v1485
        %v1487 = vand.u32 %v1282, 4294901760
        %1488 = vmatmul.f32.gmra.mxu0 %v1487
        %v1489 = vpop.f32.mrf.mxu0
        %v1490 = vadd.f32 %v1454, %v1489
        %1491 = vdwg.mxu0
        %1492 = vmatpush.msra.mxu0 0.0
        %1493 = vmatpush.msra.mxu0 0.0
        %1494 = vmatpush.msra.mxu0 0.0
        %1495 = vmatpush.msra.mxu0 0.0
        %1496 = vmatpush.msra.mxu0 0.0
        %1497 = vmatpush.msra.mxu0 0.0
        %1498 = vmatpush.msra.mxu0 0.0
        %1499 = vmatpush.msra.mxu0 0.0
        %1500 = vmatpush.msra.mxu0 0.0
        %1501 = vmatpush.msra.mxu0 0.0
        %1502 = vmatpush.msra.mxu0 0.0
        %1503 = vmatpush.msra.mxu0 0.0
        %1504 = vmatpush.msra.mxu0 0.0
        %1505 = vmatpush.msra.mxu0 0.0
        %1506 = vmatpush.msra.mxu0 0.0
        %v1507 = vand.u32 %v1285, 4294901760
        %1508 = vmatpush.msra.mxu0 %v1507
        %v1509 = vand.u32 %v1273, 4294901760
        %1510 = vmatmul.f32.gmra.mxu0 %v1509
        %v1511 = vpop.f32.mrf.mxu0
        %v1512 = vadd.f32 %v1478, %v1511
        %v1513 = vand.u32 %v1276, 4294901760
        %1514 = vmatmul.f32.gmra.mxu0 %v1513
        %v1515 = vpop.f32.mrf.mxu0
        %v1516 = vadd.f32 %v1482, %v1515
        %v1517 = vand.u32 %v1279, 4294901760
        %1518 = vmatmul.f32.gmra.mxu0 %v1517
        %v1519 = vpop.f32.mrf.mxu0
        %v1520 = vadd.f32 %v1486, %v1519
        %v1521 = vand.u32 %v1282, 4294901760
        %1522 = vmatmul.f32.gmra.mxu0 %v1521
        %v1523 = vpop.f32.mrf.mxu0
        %v1524 = vadd.f32 %v1490, %v1523
        %1525 = vdwg.mxu0
        %v1526 = vadd.f32 %v1253, %v1512
        %v1527 = vadd.f32 %v1257, %v1516
        %v1528 = vadd.f32 %v1261, %v1520
        %v1529 = vadd.f32 %v1265, %v1524
        %1530 = vst [vmem:[%s267] sm:$0xff] %v1526
        %1531 = vst [vmem:[%s267 + $0x8] sm:$0xff] %v1527
        %1532 = vst [vmem:[%s267 + $0x10] sm:$0xff] %v1528
        %1533 = vst [vmem:[%s267 + $0x18] sm:$0xff] %v1529
        %s1534 = sand.u32 %s181, 1
        %s1535 = scalar_lea.sflag [#allocation3], %s1534
        %s1536 = sand.u32 %s181, 1
        %s1537 = smul.addr %s1536, 32
        %s1538 = scalar_lea.vmem [#allocation2], %s1537
        // Predicated region
        $region49: #{tpu_custom_call.1} parent=47 // pred_check
          %p1539 = pneg %p191
        $region50: #{tpu_custom_call.1} parent=47 // pred_check_branch
          %1541 = sbr.rel (%p1539) target = $region52
        $region51: #{tpu_custom_call.1} parent=47 // pred_region
          %1543 = vsyncadd %s1535, 0
          %s1544 = smul.addr %s21, 8
          %s1545 = scalar_lea.hbm %s7, %s1544
          %s1546 = sshll.u32 %s1538, 4
          %s1547 = int_to_ptr.vmem [resolvable:$true] %s1546
          %s1548 = sshll.u32 %s1545, 4
          %s1549 = int_to_ptr.hbm [resolvable:$true] %s1548
          %1554 = dma.vmem_to_hbm [thread:$0]  %s1547, 512, %s1549, %s1535, 128, 256, 8
        $region52: #{tpu_custom_call.1} parent=47 // pred_fallthru
          _
      $region48: #{tpu_custom_call.1} parent=5 // pred_fallthru
        _
      %p1555 = scmp.le.s32.totalorder 2, %s16
      // Predicated region
      $region53: #{tpu_custom_call.1} parent=5 // pred_check
        %p1556 = pneg %p1555
      $region54: #{tpu_custom_call.1} parent=5 // pred_check_branch
        %1558 = sbr.rel (%p1556) target = $region56
      $region55: #{tpu_custom_call.1} parent=5 // pred_region
        %s1559 = ssub.s32 %s16, 2
        // Predicated region
        $region57: #{tpu_custom_call.1} parent=55 // pred_check
          %p1560 = pneg %p197
        $region58: #{tpu_custom_call.1} parent=55 // pred_check_branch
          %1562 = sbr.rel (%p1560) target = $region60
        $region59: #{tpu_custom_call.1} parent=55 // pred_region
          %s1563 = sand.u32 %s182, 1
          %s1564 = scalar_lea.sflag [#allocation3], %s1563
          %s1565 = sand.u32 %s182, 1
          %s1566 = smul.addr %s1565, 32
          %s1567 = scalar_lea.vmem [#allocation2], %s1566
          %1569 = dma.done %s1564, 512
        $region60: #{tpu_custom_call.1} parent=55 // pred_fallthru
          _
      $region56: #{tpu_custom_call.1} parent=5 // pred_fallthru
        _
    $region6: #{tpu_custom_call.1} parent=1 // loop_footer
      %s20 = sadd.s32 1, %s16
    $region7: #{tpu_custom_call.1} parent=1 // loop_footer_branch
      %15 = sbr.rel target = $region3
    $region8: #{tpu_custom_call.1} parent=1 // loop_exit
      _
    %1570 = vsyncpa [#allocation3], 1
    %s1571 = scalar_lea.sflag [#allocation3], 1
    %1572 = vsyncpa %s1571, 1

</llo_original>
